<compile_context>
chip_gen: v6e
topology: v6e:2x2x1
jax: 0.10.0
libtpu: 0.0.40
codegen_flags: <defaults>
</compile_context>

<pallas_src>
import math
import jax
import jax.numpy as jnp
from jax.experimental import pallas as pl
from jax.experimental.pallas import tpu as pltpu

HEADS = 8


# ---------------------------------------------------------------------------
# Kernel: one grid step = `bt` batch rows x `kq` query rows, end-to-end.
# ---------------------------------------------------------------------------
def _mhatt_kernel(q_ref, k_ref, v_ref, maskb_ref, wqkv_ref, wm_ref, b_ref,
                  out_ref, att_ref):
    # q_ref:     (bt, kq, D)          query-stream activation tile
    # k_ref:     (bt, K,  D)          key-stream activations (full key axis)
    # v_ref:     (bt, K,  D)          value-stream activations (full key axis)
    # maskb_ref: (bt, 1,  K)          additive mask bias (-1e9 masked, 0 keep)
    # wqkv_ref:  (3, D, H)            [in,out] weights; Wq pre-scaled by 1/sqrt(dk)
    # wm_ref:    (H, H)               [in,out] merge weight
    # b_ref:     (4, 1, H)            packed [bq*scale, bk, bv, b_merge]
    # out_ref:   (bt, kq, H)
    # att_ref:   (bt, HEADS, kq, K)   batch-major: module layout, no wrapper transpose
    bt, kq, D = q_ref.shape
    K = k_ref.shape[1]
    H = wqkv_ref.shape[-1]
    dk = H // HEADS
    cd = wqkv_ref.dtype          # matmul input dtype (bf16 on v6e/v7x if requested)

    # --- Q/K/V projections: one dot per stream over the whole row slab
    #     (weights already [in, out]; scale already folded into Wq/bq).
    q = jnp.dot(q_ref[...].reshape(bt * kq, D).astype(cd), wqkv_ref[0],
                preferred_element_type=jnp.float32) + b_ref[0]
    k = jnp.dot(k_ref[...].reshape(bt * K, D).astype(cd), wqkv_ref[1],
                preferred_element_type=jnp.float32) + b_ref[1]
    v = jnp.dot(v_ref[...].reshape(bt * K, D).astype(cd), wqkv_ref[2],
                preferred_element_type=jnp.float32) + b_ref[2]

    # --- split heads into a batch-major group dim (g = b*HEADS + h) so the
    #     score / attention tensors come out directly in (b, h, q, k) order.
    #     Lane slices are vreg-aligned (and free) at production dk (>=128).
    # TODO(synk): replace the per-head slice loop with one fused relayout
    # (pltpu.einshape) once middle-dim transposes lower on all targets.
    def split_heads(t, rows):
        t = t.reshape(bt, rows, H)
        hs = [t[..., h * dk:(h + 1) * dk] for h in range(HEADS)]   # lane slices
        return jnp.stack(hs, axis=1).reshape(bt * HEADS, rows, dk).astype(cd)

    qg = split_heads(q, kq)
    kg = split_heads(k, K)
    vg = split_heads(v, K)

    # --- head-batched scores + additive mask + softmax (all heads, one pass).
    #     NOTE: additive mask equals masked_fill semantics except in the
    #     degenerate all-keys-masked row case (both give ~0 weight on masked keys).
    s = jnp.einsum('gqd,gkd->gqk', qg, kg, preferred_element_type=jnp.float32)
    s = s.reshape(bt, HEADS, kq, K) + maskb_ref[...][:, :, None, :]
    s = s - jnp.max(s, axis=-1, keepdims=True)
    p = jnp.exp(s)
    p = p * pl.reciprocal(jnp.sum(p, axis=-1, keepdims=True), approx=True)
    att_ref[...] = p.astype(att_ref.dtype)          # single batch-major store
    # TODO(synk): attention dropout (p=0.1) is identity here (eval-mode semantics).

    # --- head-batched context matmul, merge heads back to (bt*kq, H).
    ctx = jnp.einsum('gqk,gkd->gqd', p.reshape(bt * HEADS, kq, K).astype(cd), vg,
                     preferred_element_type=jnp.float32)
    ctx = ctx.reshape(bt, HEADS, kq, dk)
    ctx = jnp.concatenate([ctx[:, h] for h in range(HEADS)], axis=-1)   # (bt,kq,H)

    out = jnp.dot(ctx.reshape(bt * kq, H).astype(cd), wm_ref[...],
                  preferred_element_type=jnp.float32) + b_ref[3]
    out_ref[...] = out.reshape(bt, kq, H).astype(out_ref.dtype)


# ---------------------------------------------------------------------------
# One-time parameter preparation (do NOT call per forward).
# ---------------------------------------------------------------------------
def prepare_params(params, *, compute_dtype=jnp.float32):
    """Pre-transpose weights to [in,out], fold 1/sqrt(d_k) into Wq/bq, pack."""
    H = params["wq"].shape[0]
    assert H % HEADS == 0
    scale = 1.0 / math.sqrt(H // HEADS)
    wqkv = jnp.stack([params["wq"].T * scale, params["wk"].T, params["wv"].T],
                     axis=0).astype(compute_dtype)                        # (3,D,H)
    wm = params["wm"].T.astype(compute_dtype)                             # (H,H)
    biases = jnp.stack([params["bq"] * scale, params["bk"], params["bv"],
                        params["bm"]], axis=0).reshape(4, 1, H)
    return {"wqkv": wqkv, "wm": wm, "biases": biases.astype(jnp.float32)}


# ---------------------------------------------------------------------------
# Wrapper
# ---------------------------------------------------------------------------
def mhatt_forward(v, key, query, mask, prep, *, bt=None, kq=None,
                  att_dtype=jnp.float32):
    B, K, D = query.shape
    H = prep["wqkv"].shape[-1]

    # Batch tile: aim for >=2 grid steps (DMA pipelining; v7x megacore needs >=2).
    if bt is None:
        bt = max(1, B // 4)
        while B % bt:
            bt -= 1
    assert B % bt == 0
    nb = B // bt

    # Query tile: at production K, tile queries (keys stay full so softmax is
    # exact) so the (bt, HEADS, kq, K) score/att blocks fit VMEM on v7x (64 MiB).
    if kq is None:
        kq = K
        for cand in (512, 256, 128):
            if K > cand and K % cand == 0:
                kq = cand
                break
    assert K % kq == 0
    nq = K // kq

    # Precomputed additive mask bias (one compare total, not per grid step).
    mask_bool = jnp.reshape(mask, (B, 1, K)).astype(bool)
    mask_bias = jnp.where(mask_bool, -1e9, 0.0).astype(jnp.float32)        # (B,1,K)

    atted, att = pl.pallas_call(
        _mhatt_kernel,
        grid=(nb, nq),
        in_specs=[
            pl.BlockSpec((bt, kq, D), lambda i, j: (i, j, 0)),   # query stream
            pl.BlockSpec((bt, K, D), lambda i, j: (i, 0, 0)),    # key stream
            pl.BlockSpec((bt, K, D), lambda i, j: (i, 0, 0)),    # value stream
            pl.BlockSpec((bt, 1, K), lambda i, j: (i, 0, 0)),    # additive mask
            # Grid-invariant operands (constant index maps).
            # TODO(synk): single-buffer these (pipeline_mode=pl.Buffered(1)) at
            # production D/H to reclaim VMEM headroom.
            pl.BlockSpec((3, D, H), lambda i, j: (0, 0, 0)),     # packed Wq/Wk/Wv
            pl.BlockSpec((H, H), lambda i, j: (0, 0)),           # W_merge
            pl.BlockSpec((4, 1, H), lambda i, j: (0, 0, 0)),     # packed biases
        ],
        out_specs=[
            pl.BlockSpec((bt, kq, H), lambda i, j: (i, j, 0)),
            pl.BlockSpec((bt, HEADS, kq, K), lambda i, j: (i, 0, j, 0)),
        ],
        out_shape=(
            jax.ShapeDtypeStruct((B, K, H), jnp.float32),
            # At production sizes pass att_dtype=jnp.bfloat16 to halve the
            # dominant HBM write (HEADS*B*K^2 elements).
            jax.ShapeDtypeStruct((B, HEADS, K, K), att_dtype),
        ),
        compiler_params=pltpu.CompilerParams(
            dimension_semantics=("parallel", "parallel"),
            vmem_limit_bytes=64 * 1024 * 1024),
    )(query, key, v, mask_bias, prep["wqkv"], prep["wm"], prep["biases"])

    return atted, att


# ---------------------------------------------------------------------------
# Pure-JAX reference (verification only)
# ---------------------------------------------------------------------------
def reference(v, key, query, mask, p):
    B, K, D = query.shape
    H = p["wq"].shape[0]
    dk = H // HEADS
    lin = lambda x, w, b: x @ w.T + b

    q = lin(query, p["wq"], p["bq"]).reshape(B, K, HEADS, dk).transpose(0, 2, 1, 3)
    k = lin(key, p["wk"], p["bk"]).reshape(B, K, HEADS, dk).transpose(0, 2, 1, 3)
    vv = lin(v, p["wv"], p["bv"]).reshape(B, K, HEADS, dk).transpose(0, 2, 1, 3)

    s = jnp.einsum("bhqd,bhkd->bhqk", q, k) / math.sqrt(dk)
    s = jnp.where(mask, -1e9, s)
    att = jax.nn.softmax(s, axis=-1)
    ctx = jnp.einsum("bhqk,bhkd->bhqd", att, vv).transpose(0, 2, 1, 3).reshape(B, K, H)
    atted = lin(ctx, p["wm"], p["bm"])
    return atted, att


def init_params(key0, relation_dim, num_hid):
    ks = jax.random.split(key0, 8)

    def lin_init(kw, kb, out_f, in_f):
        w = jax.random.normal(kw, (out_f, in_f), jnp.float32) / math.sqrt(in_f)
        b = 0.01 * jax.random.normal(kb, (out_f,), jnp.float32)
        return w, b

    # TODO(synk): FCNet's weight_norm parametrization is folded into a plain
    # effective Linear weight (identical forward math at inference).
    p = {}
    p["wq"], p["bq"] = lin_init(ks[0], ks[1], num_hid, relation_dim)
    p["wk"], p["bk"] = lin_init(ks[2], ks[3], num_hid, relation_dim)
    p["wv"], p["bv"] = lin_init(ks[4], ks[5], num_hid, relation_dim)
    p["wm"], p["bm"] = lin_init(ks[6], ks[7], num_hid, num_hid)
    return p


if __name__ == "__main__":
    B, K, D, H = 2, 8, 32, 32          # batch, tokens, relation_dim, num_hid (d_k=4)
    root = jax.random.PRNGKey(0)
    k_q, k_k, k_v, k_p = jax.random.split(root, 4)

    query = jax.random.normal(k_q, (B, K, D), jnp.float32)
    key_t = jax.random.normal(k_k, (B, K, D), jnp.float32)
    value = jax.random.normal(k_v, (B, K, D), jnp.float32)
    # batch 0: no masking; batch 1: last two keys masked (True = masked)
    valid = jnp.array([K, K - 2])
    mask = (jnp.arange(K)[None, :] >= valid[:, None]).reshape(B, 1, 1, K)
    params = init_params(k_p, D, H)

    prep = prepare_params(params)                 # one-time packing / transposes
    atted, att = mhatt_forward(value, key_t, query, mask, prep)
    atted = jax.block_until_ready(atted)
    att = jax.block_until_ready(att)

    with jax.default_matmul_precision("highest"):
        ref_atted, ref_att = reference(value, key_t, query, mask, params)

    assert atted.shape == (B, K, H) and att.shape == (B, HEADS, K, K)
    assert jnp.allclose(att, ref_att, atol=2e-2, rtol=2e-2)
    assert jnp.allclose(atted, ref_atted, atol=2e-2, rtol=2e-2)

    print("KERNEL_OK")
</pallas_src>

<mosaic_0001>
module attributes {stable_mosaic.version = 11 : i64} {
  func.func @_mhatt_kernel(%arg0: i32, %arg1: i32, %arg2: memref<1x8x32xf32, #tpu.memory_space<vmem>>, %arg3: memref<1x8x32xf32, #tpu.memory_space<vmem>>, %arg4: memref<1x8x32xf32, #tpu.memory_space<vmem>>, %arg5: memref<1x1x8xf32, #tpu.memory_space<vmem>>, %arg6: memref<3x32x32xf32, #tpu.memory_space<vmem>>, %arg7: memref<32x32xf32, #tpu.memory_space<vmem>>, %arg8: memref<4x1x32xf32, #tpu.memory_space<vmem>>, %arg9: memref<1x8x32xf32, #tpu.memory_space<vmem>>, %arg10: memref<1x8x8x8xf32, #tpu.memory_space<vmem>>) attributes {dimension_semantics = [#tpu.dimension_semantics<parallel>, #tpu.dimension_semantics<parallel>], iteration_bounds = array<i64: 2, 1>, scalar_prefetch = 0 : i64, scratch_operands = 0 : i64, tpu.core_type = #tpu.core_type<tc>, window_params = [{transform_indices = @transform_0, window_bounds = array<i64: 1, 8, 32>}, {transform_indices = @transform_1, window_bounds = array<i64: 1, 8, 32>}, {transform_indices = @transform_2, window_bounds = array<i64: 1, 8, 32>}, {transform_indices = @transform_3, window_bounds = array<i64: 1, 1, 8>}, {pipeline_mode = #tpu.pipeline_mode<synchronous>, transform_indices = @transform_4, window_bounds = array<i64: 3, 32, 32>}, {pipeline_mode = #tpu.pipeline_mode<synchronous>, transform_indices = @transform_5, window_bounds = array<i64: 32, 32>}, {pipeline_mode = #tpu.pipeline_mode<synchronous>, transform_indices = @transform_6, window_bounds = array<i64: 4, 1, 32>}, {transform_indices = @transform_7, window_bounds = array<i64: 1, 8, 32>}, {transform_indices = @transform_8, window_bounds = array<i64: 1, 8, 8, 8>}]} {
    %c0 = arith.constant 0 : index
    %c0_0 = arith.constant 0 : index
    %c0_1 = arith.constant 0 : index
    %0 = vector.load %arg2[%c0, %c0_0, %c0_1] : memref<1x8x32xf32, #tpu.memory_space<vmem>>, vector<1x8x32xf32>
    %1 = vector.shape_cast %0 : vector<1x8x32xf32> to vector<8x32xf32>
    %c0_2 = arith.constant 0 : index
    %c0_3 = arith.constant 0 : index
    %c0_4 = arith.constant 0 : index
    %2 = vector.load %arg6[%c0_2, %c0_3, %c0_4] : memref<3x32x32xf32, #tpu.memory_space<vmem>>, vector<1x32x32xf32>
    %3 = vector.shape_cast %2 : vector<1x32x32xf32> to vector<32x32xf32>
    %cst = arith.constant dense<0.000000e+00> : vector<8x32xf32>
    %4 = tpu.matmul %1, %3, %cst {dimension_numbers = #tpu.dot_dimension_numbers<[1], [0], [0], [1], [0, 0, 1, 1], [], []>} : vector<8x32xf32>, vector<32x32xf32>, vector<8x32xf32> -> vector<8x32xf32>
    %c0_5 = arith.constant 0 : index
    %c0_6 = arith.constant 0 : index
    %c0_7 = arith.constant 0 : index
    %5 = vector.load %arg8[%c0_5, %c0_6, %c0_7] : memref<4x1x32xf32, #tpu.memory_space<vmem>>, vector<1x1x32xf32>
    %6 = vector.shape_cast %5 : vector<1x1x32xf32> to vector<1x32xf32>
    %7 = vector.broadcast %6 : vector<1x32xf32> to vector<8x32xf32>
    %8 = arith.addf %4, %7 : vector<8x32xf32>
    %c0_8 = arith.constant 0 : index
    %c0_9 = arith.constant 0 : index
    %c0_10 = arith.constant 0 : index
    %9 = vector.load %arg3[%c0_8, %c0_9, %c0_10] : memref<1x8x32xf32, #tpu.memory_space<vmem>>, vector<1x8x32xf32>
    %10 = vector.shape_cast %9 : vector<1x8x32xf32> to vector<8x32xf32>
    %c1 = arith.constant 1 : index
    %c0_11 = arith.constant 0 : index
    %c0_12 = arith.constant 0 : index
    %11 = vector.load %arg6[%c1, %c0_11, %c0_12] : memref<3x32x32xf32, #tpu.memory_space<vmem>>, vector<1x32x32xf32>
    %12 = vector.shape_cast %11 : vector<1x32x32xf32> to vector<32x32xf32>
    %cst_13 = arith.constant dense<0.000000e+00> : vector<8x32xf32>
    %13 = tpu.matmul %10, %12, %cst_13 {dimension_numbers = #tpu.dot_dimension_numbers<[1], [0], [0], [1], [0, 0, 1, 1], [], []>} : vector<8x32xf32>, vector<32x32xf32>, vector<8x32xf32> -> vector<8x32xf32>
    %c1_14 = arith.constant 1 : index
    %c0_15 = arith.constant 0 : index
    %c0_16 = arith.constant 0 : index
    %14 = vector.load %arg8[%c1_14, %c0_15, %c0_16] : memref<4x1x32xf32, #tpu.memory_space<vmem>>, vector<1x1x32xf32>
    %15 = vector.shape_cast %14 : vector<1x1x32xf32> to vector<1x32xf32>
    %16 = vector.broadcast %15 : vector<1x32xf32> to vector<8x32xf32>
    %17 = arith.addf %13, %16 : vector<8x32xf32>
    %c0_17 = arith.constant 0 : index
    %c0_18 = arith.constant 0 : index
    %c0_19 = arith.constant 0 : index
    %18 = vector.load %arg4[%c0_17, %c0_18, %c0_19] : memref<1x8x32xf32, #tpu.memory_space<vmem>>, vector<1x8x32xf32>
    %19 = vector.shape_cast %18 : vector<1x8x32xf32> to vector<8x32xf32>
    %c2 = arith.constant 2 : index
    %c0_20 = arith.constant 0 : index
    %c0_21 = arith.constant 0 : index
    %20 = vector.load %arg6[%c2, %c0_20, %c0_21] : memref<3x32x32xf32, #tpu.memory_space<vmem>>, vector<1x32x32xf32>
    %21 = vector.shape_cast %20 : vector<1x32x32xf32> to vector<32x32xf32>
    %cst_22 = arith.constant dense<0.000000e+00> : vector<8x32xf32>
    %22 = tpu.matmul %19, %21, %cst_22 {dimension_numbers = #tpu.dot_dimension_numbers<[1], [0], [0], [1], [0, 0, 1, 1], [], []>} : vector<8x32xf32>, vector<32x32xf32>, vector<8x32xf32> -> vector<8x32xf32>
    %c2_23 = arith.constant 2 : index
    %c0_24 = arith.constant 0 : index
    %c0_25 = arith.constant 0 : index
    %23 = vector.load %arg8[%c2_23, %c0_24, %c0_25] : memref<4x1x32xf32, #tpu.memory_space<vmem>>, vector<1x1x32xf32>
    %24 = vector.shape_cast %23 : vector<1x1x32xf32> to vector<1x32xf32>
    %25 = vector.broadcast %24 : vector<1x32xf32> to vector<8x32xf32>
    %26 = arith.addf %22, %25 : vector<8x32xf32>
    %27 = vector.shape_cast %8 : vector<8x32xf32> to vector<1x8x32xf32>
    %28 = vector.extract_strided_slice %27 {offsets = [0, 0, 0], sizes = [1, 8, 4], strides = [1, 1, 1]} : vector<1x8x32xf32> to vector<1x8x4xf32>
    %29 = vector.extract_strided_slice %27 {offsets = [0, 0, 4], sizes = [1, 8, 4], strides = [1, 1, 1]} : vector<1x8x32xf32> to vector<1x8x4xf32>
    %30 = vector.extract_strided_slice %27 {offsets = [0, 0, 8], sizes = [1, 8, 4], strides = [1, 1, 1]} : vector<1x8x32xf32> to vector<1x8x4xf32>
    %31 = vector.extract_strided_slice %27 {offsets = [0, 0, 12], sizes = [1, 8, 4], strides = [1, 1, 1]} : vector<1x8x32xf32> to vector<1x8x4xf32>
    %32 = vector.extract_strided_slice %27 {offsets = [0, 0, 16], sizes = [1, 8, 4], strides = [1, 1, 1]} : vector<1x8x32xf32> to vector<1x8x4xf32>
    %33 = vector.extract_strided_slice %27 {offsets = [0, 0, 20], sizes = [1, 8, 4], strides = [1, 1, 1]} : vector<1x8x32xf32> to vector<1x8x4xf32>
    %34 = vector.extract_strided_slice %27 {offsets = [0, 0, 24], sizes = [1, 8, 4], strides = [1, 1, 1]} : vector<1x8x32xf32> to vector<1x8x4xf32>
    %35 = vector.extract_strided_slice %27 {offsets = [0, 0, 28], sizes = [1, 8, 4], strides = [1, 1, 1]} : vector<1x8x32xf32> to vector<1x8x4xf32>
    %36 = vector.shape_cast %28 : vector<1x8x4xf32> to vector<1x1x8x4xf32>
    %37 = vector.shape_cast %29 : vector<1x8x4xf32> to vector<1x1x8x4xf32>
    %38 = vector.shape_cast %30 : vector<1x8x4xf32> to vector<1x1x8x4xf32>
    %39 = vector.shape_cast %31 : vector<1x8x4xf32> to vector<1x1x8x4xf32>
    %40 = vector.shape_cast %32 : vector<1x8x4xf32> to vector<1x1x8x4xf32>
    %41 = vector.shape_cast %33 : vector<1x8x4xf32> to vector<1x1x8x4xf32>
    %42 = vector.shape_cast %34 : vector<1x8x4xf32> to vector<1x1x8x4xf32>
    %43 = vector.shape_cast %35 : vector<1x8x4xf32> to vector<1x1x8x4xf32>
    %44 = tpu.concatenate %36, %37, %38, %39, %40, %41, %42, %43 in 1 : vector<1x1x8x4xf32>, vector<1x1x8x4xf32>, vector<1x1x8x4xf32>, vector<1x1x8x4xf32>, vector<1x1x8x4xf32>, vector<1x1x8x4xf32>, vector<1x1x8x4xf32>, vector<1x1x8x4xf32> -> vector<1x8x8x4xf32>
    %45 = vector.shape_cast %44 : vector<1x8x8x4xf32> to vector<8x8x4xf32>
    %46 = vector.shape_cast %17 : vector<8x32xf32> to vector<1x8x32xf32>
    %47 = vector.extract_strided_slice %46 {offsets = [0, 0, 0], sizes = [1, 8, 4], strides = [1, 1, 1]} : vector<1x8x32xf32> to vector<1x8x4xf32>
    %48 = vector.extract_strided_slice %46 {offsets = [0, 0, 4], sizes = [1, 8, 4], strides = [1, 1, 1]} : vector<1x8x32xf32> to vector<1x8x4xf32>
    %49 = vector.extract_strided_slice %46 {offsets = [0, 0, 8], sizes = [1, 8, 4], strides = [1, 1, 1]} : vector<1x8x32xf32> to vector<1x8x4xf32>
    %50 = vector.extract_strided_slice %46 {offsets = [0, 0, 12], sizes = [1, 8, 4], strides = [1, 1, 1]} : vector<1x8x32xf32> to vector<1x8x4xf32>
    %51 = vector.extract_strided_slice %46 {offsets = [0, 0, 16], sizes = [1, 8, 4], strides = [1, 1, 1]} : vector<1x8x32xf32> to vector<1x8x4xf32>
    %52 = vector.extract_strided_slice %46 {offsets = [0, 0, 20], sizes = [1, 8, 4], strides = [1, 1, 1]} : vector<1x8x32xf32> to vector<1x8x4xf32>
    %53 = vector.extract_strided_slice %46 {offsets = [0, 0, 24], sizes = [1, 8, 4], strides = [1, 1, 1]} : vector<1x8x32xf32> to vector<1x8x4xf32>
    %54 = vector.extract_strided_slice %46 {offsets = [0, 0, 28], sizes = [1, 8, 4], strides = [1, 1, 1]} : vector<1x8x32xf32> to vector<1x8x4xf32>
    %55 = vector.shape_cast %47 : vector<1x8x4xf32> to vector<1x1x8x4xf32>
    %56 = vector.shape_cast %48 : vector<1x8x4xf32> to vector<1x1x8x4xf32>
    %57 = vector.shape_cast %49 : vector<1x8x4xf32> to vector<1x1x8x4xf32>
    %58 = vector.shape_cast %50 : vector<1x8x4xf32> to vector<1x1x8x4xf32>
    %59 = vector.shape_cast %51 : vector<1x8x4xf32> to vector<1x1x8x4xf32>
    %60 = vector.shape_cast %52 : vector<1x8x4xf32> to vector<1x1x8x4xf32>
    %61 = vector.shape_cast %53 : vector<1x8x4xf32> to vector<1x1x8x4xf32>
    %62 = vector.shape_cast %54 : vector<1x8x4xf32> to vector<1x1x8x4xf32>
    %63 = tpu.concatenate %55, %56, %57, %58, %59, %60, %61, %62 in 1 : vector<1x1x8x4xf32>, vector<1x1x8x4xf32>, vector<1x1x8x4xf32>, vector<1x1x8x4xf32>, vector<1x1x8x4xf32>, vector<1x1x8x4xf32>, vector<1x1x8x4xf32>, vector<1x1x8x4xf32> -> vector<1x8x8x4xf32>
    %64 = vector.shape_cast %63 : vector<1x8x8x4xf32> to vector<8x8x4xf32>
    %65 = vector.shape_cast %26 : vector<8x32xf32> to vector<1x8x32xf32>
    %66 = vector.extract_strided_slice %65 {offsets = [0, 0, 0], sizes = [1, 8, 4], strides = [1, 1, 1]} : vector<1x8x32xf32> to vector<1x8x4xf32>
    %67 = vector.extract_strided_slice %65 {offsets = [0, 0, 4], sizes = [1, 8, 4], strides = [1, 1, 1]} : vector<1x8x32xf32> to vector<1x8x4xf32>
    %68 = vector.extract_strided_slice %65 {offsets = [0, 0, 8], sizes = [1, 8, 4], strides = [1, 1, 1]} : vector<1x8x32xf32> to vector<1x8x4xf32>
    %69 = vector.extract_strided_slice %65 {offsets = [0, 0, 12], sizes = [1, 8, 4], strides = [1, 1, 1]} : vector<1x8x32xf32> to vector<1x8x4xf32>
    %70 = vector.extract_strided_slice %65 {offsets = [0, 0, 16], sizes = [1, 8, 4], strides = [1, 1, 1]} : vector<1x8x32xf32> to vector<1x8x4xf32>
    %71 = vector.extract_strided_slice %65 {offsets = [0, 0, 20], sizes = [1, 8, 4], strides = [1, 1, 1]} : vector<1x8x32xf32> to vector<1x8x4xf32>
    %72 = vector.extract_strided_slice %65 {offsets = [0, 0, 24], sizes = [1, 8, 4], strides = [1, 1, 1]} : vector<1x8x32xf32> to vector<1x8x4xf32>
    %73 = vector.extract_strided_slice %65 {offsets = [0, 0, 28], sizes = [1, 8, 4], strides = [1, 1, 1]} : vector<1x8x32xf32> to vector<1x8x4xf32>
    %74 = vector.shape_cast %66 : vector<1x8x4xf32> to vector<1x1x8x4xf32>
    %75 = vector.shape_cast %67 : vector<1x8x4xf32> to vector<1x1x8x4xf32>
    %76 = vector.shape_cast %68 : vector<1x8x4xf32> to vector<1x1x8x4xf32>
    %77 = vector.shape_cast %69 : vector<1x8x4xf32> to vector<1x1x8x4xf32>
    %78 = vector.shape_cast %70 : vector<1x8x4xf32> to vector<1x1x8x4xf32>
    %79 = vector.shape_cast %71 : vector<1x8x4xf32> to vector<1x1x8x4xf32>
    %80 = vector.shape_cast %72 : vector<1x8x4xf32> to vector<1x1x8x4xf32>
    %81 = vector.shape_cast %73 : vector<1x8x4xf32> to vector<1x1x8x4xf32>
    %82 = tpu.concatenate %74, %75, %76, %77, %78, %79, %80, %81 in 1 : vector<1x1x8x4xf32>, vector<1x1x8x4xf32>, vector<1x1x8x4xf32>, vector<1x1x8x4xf32>, vector<1x1x8x4xf32>, vector<1x1x8x4xf32>, vector<1x1x8x4xf32>, vector<1x1x8x4xf32> -> vector<1x8x8x4xf32>
    %83 = vector.shape_cast %82 : vector<1x8x8x4xf32> to vector<8x8x4xf32>
    "tpu.trace_start"() <{level = 10 : i32, message = "gqd,gkd->gqk"}> : () -> ()
    %cst_26 = arith.constant dense<0.000000e+00> : vector<8x8x8xf32>
    %84 = tpu.matmul %45, %64, %cst_26 {dimension_numbers = #tpu.dot_dimension_numbers<[2], [2], [1], [1], [0, 0, 0, 1, 1, 1], [0], [0]>} : vector<8x8x4xf32>, vector<8x8x4xf32>, vector<8x8x8xf32> -> vector<8x8x8xf32>
    "tpu.trace_stop"() : () -> ()
    %85 = vector.shape_cast %84 : vector<8x8x8xf32> to vector<1x8x8x8xf32>
    %c0_27 = arith.constant 0 : index
    %c0_28 = arith.constant 0 : index
    %c0_29 = arith.constant 0 : index
    %86 = vector.load %arg5[%c0_27, %c0_28, %c0_29] : memref<1x1x8xf32, #tpu.memory_space<vmem>>, vector<1x1x8xf32>
    %87 = vector.shape_cast %86 : vector<1x1x8xf32> to vector<1x1x1x8xf32>
    %88 = vector.broadcast %87 : vector<1x1x1x8xf32> to vector<1x8x8x8xf32>
    %89 = arith.addf %85, %88 : vector<1x8x8x8xf32>
    %cst_30 = arith.constant dense<0xFF800000> : vector<1x8x8xf32>
    %90 = vector.multi_reduction <maximumf>, %89, %cst_30 [3] : vector<1x8x8x8xf32> to vector<1x8x8xf32>
    %91 = vector.shape_cast %90 : vector<1x8x8xf32> to vector<1x8x8x1xf32>
    %92 = vector.broadcast %91 : vector<1x8x8x1xf32> to vector<1x8x8x8xf32>
    %93 = arith.subf %89, %92 : vector<1x8x8x8xf32>
    %94 = math.exp %93 : vector<1x8x8x8xf32>
    %cst_31 = arith.constant dense<0.000000e+00> : vector<1x8x8xf32>
    %95 = vector.multi_reduction <add>, %94, %cst_31 [3] : vector<1x8x8x8xf32> to vector<1x8x8xf32>
    %96 = vector.shape_cast %95 : vector<1x8x8xf32> to vector<1x8x8x1xf32>
    %97 = tpu.reciprocal %96 {approx = true} : vector<1x8x8x1xf32> -> vector<1x8x8x1xf32>
    %98 = vector.broadcast %97 : vector<1x8x8x1xf32> to vector<1x8x8x8xf32>
    %99 = arith.mulf %94, %98 : vector<1x8x8x8xf32>
    %c0_32 = arith.constant 0 : index
    %c0_33 = arith.constant 0 : index
    %c0_34 = arith.constant 0 : index
    %c0_35 = arith.constant 0 : index
    %100 = vector.load %arg10[%c0_32, %c0_33, %c0_34, %c0_35] : memref<1x8x8x8xf32, #tpu.memory_space<vmem>>, vector<1x8x8x8xf32>
    tpu.vector_store %arg10[%c0_32, %c0_33, %c0_34, %c0_35], %99 {strides = array<i32>} : memref<1x8x8x8xf32, #tpu.memory_space<vmem>>, vector<1x8x8x8xf32>,
    %101 = vector.shape_cast %99 : vector<1x8x8x8xf32> to vector<8x8x8xf32>
    "tpu.trace_start"() <{level = 10 : i32, message = "gqk,gkd->gqd"}> : () -> ()
    %cst_36 = arith.constant dense<0.000000e+00> : vector<8x8x4xf32>
    %102 = tpu.matmul %101, %83, %cst_36 {dimension_numbers = #tpu.dot_dimension_numbers<[2], [1], [1], [2], [0, 0, 0, 1, 1, 2], [0], [0]>} : vector<8x8x8xf32>, vector<8x8x4xf32>, vector<8x8x4xf32> -> vector<8x8x4xf32>
    "tpu.trace_stop"() : () -> ()
    %103 = vector.shape_cast %102 : vector<8x8x4xf32> to vector<1x8x8x4xf32>
    %104 = vector.extract_strided_slice %103 {offsets = [0, 0, 0, 0], sizes = [1, 1, 8, 4], strides = [1, 1, 1, 1]} : vector<1x8x8x4xf32> to vector<1x1x8x4xf32>
    %105 = vector.shape_cast %104 : vector<1x1x8x4xf32> to vector<1x8x4xf32>
    %106 = vector.extract_strided_slice %103 {offsets = [0, 1, 0, 0], sizes = [1, 1, 8, 4], strides = [1, 1, 1, 1]} : vector<1x8x8x4xf32> to vector<1x1x8x4xf32>
    %107 = vector.shape_cast %106 : vector<1x1x8x4xf32> to vector<1x8x4xf32>
    %108 = vector.extract_strided_slice %103 {offsets = [0, 2, 0, 0], sizes = [1, 1, 8, 4], strides = [1, 1, 1, 1]} : vector<1x8x8x4xf32> to vector<1x1x8x4xf32>
    %109 = vector.shape_cast %108 : vector<1x1x8x4xf32> to vector<1x8x4xf32>
    %110 = vector.extract_strided_slice %103 {offsets = [0, 3, 0, 0], sizes = [1, 1, 8, 4], strides = [1, 1, 1, 1]} : vector<1x8x8x4xf32> to vector<1x1x8x4xf32>
    %111 = vector.shape_cast %110 : vector<1x1x8x4xf32> to vector<1x8x4xf32>
    %112 = vector.extract_strided_slice %103 {offsets = [0, 4, 0, 0], sizes = [1, 1, 8, 4], strides = [1, 1, 1, 1]} : vector<1x8x8x4xf32> to vector<1x1x8x4xf32>
    %113 = vector.shape_cast %112 : vector<1x1x8x4xf32> to vector<1x8x4xf32>
    %114 = vector.extract_strided_slice %103 {offsets = [0, 5, 0, 0], sizes = [1, 1, 8, 4], strides = [1, 1, 1, 1]} : vector<1x8x8x4xf32> to vector<1x1x8x4xf32>
    %115 = vector.shape_cast %114 : vector<1x1x8x4xf32> to vector<1x8x4xf32>
    %116 = vector.extract_strided_slice %103 {offsets = [0, 6, 0, 0], sizes = [1, 1, 8, 4], strides = [1, 1, 1, 1]} : vector<1x8x8x4xf32> to vector<1x1x8x4xf32>
    %117 = vector.shape_cast %116 : vector<1x1x8x4xf32> to vector<1x8x4xf32>
    %118 = vector.extract_strided_slice %103 {offsets = [0, 7, 0, 0], sizes = [1, 1, 8, 4], strides = [1, 1, 1, 1]} : vector<1x8x8x4xf32> to vector<1x1x8x4xf32>
    %119 = vector.shape_cast %118 : vector<1x1x8x4xf32> to vector<1x8x4xf32>
    %120 = tpu.concatenate %105, %107, %109, %111, %113, %115, %117, %119 in 2 : vector<1x8x4xf32>, vector<1x8x4xf32>, vector<1x8x4xf32>, vector<1x8x4xf32>, vector<1x8x4xf32>, vector<1x8x4xf32>, vector<1x8x4xf32>, vector<1x8x4xf32> -> vector<1x8x32xf32>
    %121 = vector.shape_cast %120 : vector<1x8x32xf32> to vector<8x32xf32>
    %c0_37 = arith.constant 0 : index
    %c0_38 = arith.constant 0 : index
    %122 = vector.load %arg7[%c0_37, %c0_38] : memref<32x32xf32, #tpu.memory_space<vmem>>, vector<32x32xf32>
    %cst_39 = arith.constant dense<0.000000e+00> : vector<8x32xf32>
    %123 = tpu.matmul %121, %122, %cst_39 {dimension_numbers = #tpu.dot_dimension_numbers<[1], [0], [0], [1], [0, 0, 1, 1], [], []>} : vector<8x32xf32>, vector<32x32xf32>, vector<8x32xf32> -> vector<8x32xf32>
    %c3 = arith.constant 3 : index
    %c0_40 = arith.constant 0 : index
    %c0_41 = arith.constant 0 : index
    %124 = vector.load %arg8[%c3, %c0_40, %c0_41] : memref<4x1x32xf32, #tpu.memory_space<vmem>>, vector<1x1x32xf32>
    %125 = vector.shape_cast %124 : vector<1x1x32xf32> to vector<1x32xf32>
    %126 = vector.broadcast %125 : vector<1x32xf32> to vector<8x32xf32>
    %127 = arith.addf %123, %126 : vector<8x32xf32>
    %128 = vector.shape_cast %127 : vector<8x32xf32> to vector<1x8x32xf32>
    %c0_42 = arith.constant 0 : index
    %c0_43 = arith.constant 0 : index
    %c0_44 = arith.constant 0 : index
    %129 = vector.load %arg9[%c0_42, %c0_43, %c0_44] : memref<1x8x32xf32, #tpu.memory_space<vmem>>, vector<1x8x32xf32>
    tpu.vector_store %arg9[%c0_42, %c0_43, %c0_44], %128 {strides = array<i32>} : memref<1x8x32xf32, #tpu.memory_space<vmem>>, vector<1x8x32xf32>,
    return
  }
  func.func @transform_0(%arg0: i32, %arg1: i32) -> (i32, i32, i32) {
    %c0_i32 = arith.constant 0 : i32
    %c0_i32_0 = arith.constant 0 : i32
    return %arg0, %arg1, %c0_i32 : i32, i32, i32
  }
  func.func @transform_1(%arg0: i32, %arg1: i32) -> (i32, i32, i32) {
    %c0_i32 = arith.constant 0 : i32
    %c0_i32_0 = arith.constant 0 : i32
    %c0_i32_1 = arith.constant 0 : i32
    return %arg0, %c0_i32, %c0_i32_0 : i32, i32, i32
  }
  func.func @transform_2(%arg0: i32, %arg1: i32) -> (i32, i32, i32) {
    %c0_i32 = arith.constant 0 : i32
    %c0_i32_0 = arith.constant 0 : i32
    %c0_i32_1 = arith.constant 0 : i32
    return %arg0, %c0_i32, %c0_i32_0 : i32, i32, i32
  }
  func.func @transform_3(%arg0: i32, %arg1: i32) -> (i32, i32, i32) {
    %c0_i32 = arith.constant 0 : i32
    %c0_i32_0 = arith.constant 0 : i32
    %c0_i32_1 = arith.constant 0 : i32
    return %arg0, %c0_i32, %c0_i32_0 : i32, i32, i32
  }
  func.func @transform_4(%arg0: i32, %arg1: i32) -> (i32, i32, i32) {
    %c0_i32 = arith.constant 0 : i32
    %c0_i32_0 = arith.constant 0 : i32
    %c0_i32_1 = arith.constant 0 : i32
    %c0_i32_2 = arith.constant 0 : i32
    return %c0_i32, %c0_i32_0, %c0_i32_1 : i32, i32, i32
  }
  func.func @transform_5(%arg0: i32, %arg1: i32) -> (i32, i32) {
    %c0_i32 = arith.constant 0 : i32
    %c0_i32_0 = arith.constant 0 : i32
    %c0_i32_1 = arith.constant 0 : i32
    return %c0_i32, %c0_i32_0 : i32, i32
  }
  func.func @transform_6(%arg0: i32, %arg1: i32) -> (i32, i32, i32) {
    %c0_i32 = arith.constant 0 : i32
    %c0_i32_0 = arith.constant 0 : i32
    %c0_i32_1 = arith.constant 0 : i32
    %c0_i32_2 = arith.constant 0 : i32
    return %c0_i32, %c0_i32_0, %c0_i32_1 : i32, i32, i32
  }
  func.func @transform_7(%arg0: i32, %arg1: i32) -> (i32, i32, i32) {
    %c0_i32 = arith.constant 0 : i32
    %c0_i32_0 = arith.constant 0 : i32
    return %arg0, %arg1, %c0_i32 : i32, i32, i32
  }
  func.func @transform_8(%arg0: i32, %arg1: i32) -> (i32, i32, i32, i32) {
    %c0_i32 = arith.constant 0 : i32
    %c0_i32_0 = arith.constant 0 : i32
    %c0_i32_1 = arith.constant 0 : i32
    return %arg0, %c0_i32, %arg1, %c0_i32_0 : i32, i32, i32, i32
  }
}

</mosaic_0001>

<llo_original>
// kernel: tpu_custom_call.1
$region0: #{tpu_custom_call.1}
  #allocation0 [shape = 'u32[]', space=smem, size = 0x4, offset = 0x4, fixed_abs, tag = 'smem constant byte address 0x4 - core index']
  #allocation1 [shape = 'u32[144,128]{1,0:T(1,128)}', space=vmem, size = 0x12000, scoped, tag = 'internal scratch']
  %s0 = inlined_call_operand.hbm [shape: f32[2,8,32], index: 0, kind: input, shape index: {}]
  %s1 = inlined_call_operand.hbm [shape: f32[2,8,32], index: 1, kind: input, shape index: {}]
  %s2 = inlined_call_operand.hbm [shape: f32[2,8,32], index: 2, kind: input, shape index: {}]
  %s3 = inlined_call_operand.vmem [shape: f32[2,1,8], index: 3, kind: input, shape index: {}]
  %s4 = inlined_call_operand.hbm [shape: f32[3,32,32], index: 4, kind: input, shape index: {}]
  %s5 = inlined_call_operand.hbm [shape: f32[32,32], index: 5, kind: input, shape index: {}]
  %s6 = inlined_call_operand.vmem [shape: f32[4,1,32], index: 6, kind: input, shape index: {}]
  %s7 = inlined_call_operand.hbm [shape: f32[2,8,32], index: 7, kind: output, shape index: {0}]
  %s8 = inlined_call_operand.hbm [shape: f32[2,8,8,8], index: 8, kind: output, shape index: {1}]
  %9 = xla_tuple %s7, %s8
  %s10 = sld [smem:[#allocation0]]
  $region89: #{tpu_custom_call.1} parent=0
    _
  %s12 = ssub.s32 1, %s10
  %s13 = scalar_select 0, %s12, %s10
  $region1: #{tpu_custom_call.1} parent=0
    #allocation2 [shape = 'u8[8192]{0}', space=vmem, size = 0x2000, scoped, tag = 'input window, operand 0']
    #allocation3 [shape = 's32[2]{0}', space=sflag, size = 0x8, scoped, tag = 'scoped memory for tpu_custom_call.1']
    #allocation4 [shape = 's32[2]{0}', space=sflag, size = 0x8, scoped, tag = 'scoped memory for tpu_custom_call.1']
    #allocation5 [shape = 'u8[8192]{0}', space=vmem, size = 0x2000, scoped, tag = 'input window, operand 1']
    #allocation6 [shape = 's32[2]{0}', space=sflag, size = 0x8, scoped, tag = 'scoped memory for tpu_custom_call.1']
    #allocation7 [shape = 'u8[8192]{0}', space=vmem, size = 0x2000, scoped, tag = 'input window, operand 2']
    #allocation8 [shape = 'u8[49152]{0}', space=vmem, size = 0xc000, scoped, tag = 'input window, operand 4, single buffered']
    #allocation9 [shape = 's32[1]{0}', space=sflag, size = 0x4, scoped, tag = 'scoped memory for tpu_custom_call.1']
    #allocation10 [shape = 'u8[16384]{0}', space=vmem, size = 0x4000, scoped, tag = 'input window, operand 5, single buffered']
    #allocation11 [shape = 'u8[8192]{0}', space=vmem, size = 0x2000, scoped, tag = 'output window, operand 0']
    #allocation12 [shape = 'u8[65536]{0}', space=vmem, size = 0x10000, scoped, tag = 'output window, operand 1']
    #allocation13 [shape = 's32[2]{0}', space=sflag, size = 0x8, scoped, tag = 'scoped memory for tpu_custom_call.1']
    %14 = vsyncpa [#allocation3], 0
    %s15 = scalar_lea.sflag [#allocation3], 1
    %16 = vsyncpa %s15, 0
    %17 = vsyncpa [#allocation6], 0
    %s18 = scalar_lea.sflag [#allocation6], 1
    %19 = vsyncpa %s18, 0
    %20 = vsyncpa [#allocation9], 0
    %21 = vsyncpa [#allocation4], 0
    %s22 = scalar_lea.sflag [#allocation4], 1
    %23 = vsyncpa %s22, 0
    %24 = vsyncpa [#allocation13], 0
    %s25 = scalar_lea.sflag [#allocation13], 1
    %26 = vsyncpa %s25, 0
    loop: start=0, step=1, limit=4
    $region2: #{tpu_custom_call.1} parent=1 // loop_pre_header
      _
    $region3: #{tpu_custom_call.1} parent=1 // loop_header
      %s28 = sphi 0, %s32
      %p29 = scmp.ge.s32.totalorder %s28, 4
      %s35 = sphi 0, %s47
      %s36 = sphi 0, %s43
      %s37 = sphi 0, %s35
      %s38 = sphi 0, %s36
      %s39 = sphi 0, %s37
      %s40 = sphi 0, %s38
      %s52 = sphi 0, %s54
      %s55 = sphi 0, %s52
      %s56 = sphi 0, %s55
      %s72 = sphi 0, %s56
      %s78 = sphi 0, %s80
      %s81 = sphi 0, %s78
      %s82 = sphi 0, %s81
      %s98 = sphi 0, %s82
      %s104 = sphi 0, %s106
      %s107 = sphi 0, %s104
      %s108 = sphi 0, %s107
      %s124 = sphi 0, %s108
      %s130 = sphi 0, %s132
      %s133 = sphi 0, %s130
      %s134 = sphi 0, %s133
      %s150 = sphi 0, %s134
      %s154 = sphi 0, %s154
      %s156 = sphi 0, %s154
      %s157 = sphi 0, %s156
      %s171 = sphi 0, %s157
      %s175 = sphi 0, %s175
      %s177 = sphi 0, %s175
      %s178 = sphi 0, %s177
      %s192 = sphi 0, %s178
      %s196 = sphi 0, %s196
      %s198 = sphi 0, %s196
      %s199 = sphi 0, %s198
      %s213 = sphi 0, %s199
      %s221 = sphi 0, %s223
      %s224 = sphi 0, %s221
      %s225 = sphi 0, %s224
      %s241 = sphi 0, %s225
      %s249 = sphi 0, %s251
      %s252 = sphi 0, %s249
      %s253 = sphi 0, %s252
      %s269 = sphi 0, %s253
    $region4: #{tpu_custom_call.1} parent=1 // loop_header_branch
      %31 = sbr.rel (%p29) target = $region8
    $region5: #{tpu_custom_call.1} parent=1 // loop_body
      %s33 = ssub.s32 %s28, 1
      %s34 = ssub.s32 %s28, 2
      %s41 = sadd.s32 1, %s36
      %p42 = scmp.ge.s32.totalorder %s41, 1
      %s43 = scalar_select %p42, 0, %s41
      %s44 = sadd.s32 1, %s35
      %s45 = scalar_select %p42, %s44, %s35
      %p46 = scmp.ge.s32.totalorder %s45, 2
      %s47 = scalar_select %p46, 0, %s45
      %s48 = ssub.s32 %s35, %s47
      %s49 = ssub.s32 %s36, %s43
      %s50 = sor.u32 %s48, %s49
      %p51 = scmp.eq.s32.totalorder %s50, 0
      %s53 = sadd.s32 %s52, 1
      %s54 = scalar_select %p51, %s52, %s53
      %p57 = pneg %p51
      %p58 = scmp.eq.s32.totalorder %s28, 1
      %p59 = por %p57, %p58
      %p60 = scmp.ne.s32.totalorder %s52, %s55
      %p61 = scmp.eq.s32.totalorder %s28, 0
      %p62 = por %p60, %p61
      %p63 = scmp.ne.s32.totalorder %s52, %s55
      %p64 = scmp.eq.s32.totalorder %s33, 1
      %p65 = por %p63, %p64
      %p66 = scmp.ne.s32.totalorder %s55, %s56
      %p67 = scmp.eq.s32.totalorder %s33, 0
      %p68 = por %p66, %p67
      %p69 = scmp.ne.s32.totalorder %s55, %s56
      %p70 = scmp.eq.s32.totalorder %s34, 1
      %p71 = por %p69, %p70
      %p73 = scmp.ne.s32.totalorder %s56, %s72
      %p74 = scmp.eq.s32.totalorder %s34, 0
      %p75 = por %p73, %p74
      %s76 = ssub.s32 %s35, %s47
      %p77 = scmp.eq.s32.totalorder %s76, 0
      %s79 = sadd.s32 %s78, 1
      %s80 = scalar_select %p77, %s78, %s79
      %p83 = pneg %p77
      %p84 = scmp.eq.s32.totalorder %s28, 1
      %p85 = por %p83, %p84
      %p86 = scmp.ne.s32.totalorder %s78, %s81
      %p87 = scmp.eq.s32.totalorder %s28, 0
      %p88 = por %p86, %p87
      %p89 = scmp.ne.s32.totalorder %s78, %s81
      %p90 = scmp.eq.s32.totalorder %s33, 1
      %p91 = por %p89, %p90
      %p92 = scmp.ne.s32.totalorder %s81, %s82
      %p93 = scmp.eq.s32.totalorder %s33, 0
      %p94 = por %p92, %p93
      %p95 = scmp.ne.s32.totalorder %s81, %s82
      %p96 = scmp.eq.s32.totalorder %s34, 1
      %p97 = por %p95, %p96
      %p99 = scmp.ne.s32.totalorder %s82, %s98
      %p100 = scmp.eq.s32.totalorder %s34, 0
      %p101 = por %p99, %p100
      %s102 = ssub.s32 %s35, %s47
      %p103 = scmp.eq.s32.totalorder %s102, 0
      %s105 = sadd.s32 %s104, 1
      %s106 = scalar_select %p103, %s104, %s105
      %p109 = pneg %p103
      %p110 = scmp.eq.s32.totalorder %s28, 1
      %p111 = por %p109, %p110
      %p112 = scmp.ne.s32.totalorder %s104, %s107
      %p113 = scmp.eq.s32.totalorder %s28, 0
      %p114 = por %p112, %p113
      %p115 = scmp.ne.s32.totalorder %s104, %s107
      %p116 = scmp.eq.s32.totalorder %s33, 1
      %p117 = por %p115, %p116
      %p118 = scmp.ne.s32.totalorder %s107, %s108
      %p119 = scmp.eq.s32.totalorder %s33, 0
      %p120 = por %p118, %p119
      %p121 = scmp.ne.s32.totalorder %s107, %s108
      %p122 = scmp.eq.s32.totalorder %s34, 1
      %p123 = por %p121, %p122
      %p125 = scmp.ne.s32.totalorder %s108, %s124
      %p126 = scmp.eq.s32.totalorder %s34, 0
      %p127 = por %p125, %p126
      %s128 = ssub.s32 %s35, %s47
      %p129 = scmp.eq.s32.totalorder %s128, 0
      %s131 = sadd.s32 %s130, 1
      %s132 = scalar_select %p129, %s130, %s131
      %p135 = pneg %p129
      %p136 = scmp.eq.s32.totalorder %s28, 1
      %p137 = por %p135, %p136
      %p138 = scmp.ne.s32.totalorder %s130, %s133
      %p139 = scmp.eq.s32.totalorder %s28, 0
      %p140 = por %p138, %p139
      %p141 = scmp.ne.s32.totalorder %s130, %s133
      %p142 = scmp.eq.s32.totalorder %s33, 1
      %p143 = por %p141, %p142
      %p144 = scmp.ne.s32.totalorder %s133, %s134
      %p145 = scmp.eq.s32.totalorder %s33, 0
      %p146 = por %p144, %p145
      %p147 = scmp.ne.s32.totalorder %s133, %s134
      %p148 = scmp.eq.s32.totalorder %s34, 1
      %p149 = por %p147, %p148
      %p151 = scmp.ne.s32.totalorder %s134, %s150
      %p152 = scmp.eq.s32.totalorder %s34, 0
      %p153 = por %p151, %p152
      %s155 = sadd.s32 %s154, 1
      %p158 = scmp.eq.s32.totalorder %s28, 1
      %p159 = scmp.ne.s32.totalorder %s154, %s156
      %p160 = scmp.eq.s32.totalorder %s28, 0
      %p161 = por %p159, %p160
      %p162 = scmp.ne.s32.totalorder %s154, %s156
      %p163 = scmp.eq.s32.totalorder %s33, 1
      %p164 = por %p162, %p163
      %p165 = scmp.ne.s32.totalorder %s156, %s157
      %p166 = scmp.eq.s32.totalorder %s33, 0
      %p167 = por %p165, %p166
      %p168 = scmp.ne.s32.totalorder %s156, %s157
      %p169 = scmp.eq.s32.totalorder %s34, 1
      %p170 = por %p168, %p169
      %p172 = scmp.ne.s32.totalorder %s157, %s171
      %p173 = scmp.eq.s32.totalorder %s34, 0
      %p174 = por %p172, %p173
      %s176 = sadd.s32 %s175, 1
      %p179 = scmp.eq.s32.totalorder %s28, 1
      %p180 = scmp.ne.s32.totalorder %s175, %s177
      %p181 = scmp.eq.s32.totalorder %s28, 0
      %p182 = por %p180, %p181
      %p183 = scmp.ne.s32.totalorder %s175, %s177
      %p184 = scmp.eq.s32.totalorder %s33, 1
      %p185 = por %p183, %p184
      %p186 = scmp.ne.s32.totalorder %s177, %s178
      %p187 = scmp.eq.s32.totalorder %s33, 0
      %p188 = por %p186, %p187
      %p189 = scmp.ne.s32.totalorder %s177, %s178
      %p190 = scmp.eq.s32.totalorder %s34, 1
      %p191 = por %p189, %p190
      %p193 = scmp.ne.s32.totalorder %s178, %s192
      %p194 = scmp.eq.s32.totalorder %s34, 0
      %p195 = por %p193, %p194
      %s197 = sadd.s32 %s196, 1
      %p200 = scmp.eq.s32.totalorder %s28, 1
      %p201 = scmp.ne.s32.totalorder %s196, %s198
      %p202 = scmp.eq.s32.totalorder %s28, 0
      %p203 = por %p201, %p202
      %p204 = scmp.ne.s32.totalorder %s196, %s198
      %p205 = scmp.eq.s32.totalorder %s33, 1
      %p206 = por %p204, %p205
      %p207 = scmp.ne.s32.totalorder %s198, %s199
      %p208 = scmp.eq.s32.totalorder %s33, 0
      %p209 = por %p207, %p208
      %p210 = scmp.ne.s32.totalorder %s198, %s199
      %p211 = scmp.eq.s32.totalorder %s34, 1
      %p212 = por %p210, %p211
      %p214 = scmp.ne.s32.totalorder %s199, %s213
      %p215 = scmp.eq.s32.totalorder %s34, 0
      %p216 = por %p214, %p215
      %s217 = ssub.s32 %s35, %s47
      %s218 = ssub.s32 %s36, %s43
      %s219 = sor.u32 %s217, %s218
      %p220 = scmp.eq.s32.totalorder %s219, 0
      %s222 = sadd.s32 %s221, 1
      %s223 = scalar_select %p220, %s221, %s222
      %p226 = pneg %p220
      %p227 = scmp.eq.s32.totalorder %s28, 1
      %p228 = por %p226, %p227
      %p229 = scmp.ne.s32.totalorder %s221, %s224
      %p230 = scmp.eq.s32.totalorder %s28, 0
      %p231 = por %p229, %p230
      %p232 = scmp.ne.s32.totalorder %s221, %s224
      %p233 = scmp.eq.s32.totalorder %s33, 1
      %p234 = por %p232, %p233
      %p235 = scmp.ne.s32.totalorder %s224, %s225
      %p236 = scmp.eq.s32.totalorder %s33, 0
      %p237 = por %p235, %p236
      %p238 = scmp.ne.s32.totalorder %s224, %s225
      %p239 = scmp.eq.s32.totalorder %s34, 1
      %p240 = por %p238, %p239
      %p242 = scmp.ne.s32.totalorder %s225, %s241
      %p243 = scmp.eq.s32.totalorder %s34, 0
      %p244 = por %p242, %p243
      %s245 = ssub.s32 %s35, %s47
      %s246 = ssub.s32 %s36, %s43
      %s247 = sor.u32 %s245, %s246
      %p248 = scmp.eq.s32.totalorder %s247, 0
      %s250 = sadd.s32 %s249, 1
      %s251 = scalar_select %p248, %s249, %s250
      %p254 = pneg %p248
      %p255 = scmp.eq.s32.totalorder %s28, 1
      %p256 = por %p254, %p255
      %p257 = scmp.ne.s32.totalorder %s249, %s252
      %p258 = scmp.eq.s32.totalorder %s28, 0
      %p259 = por %p257, %p258
      %p260 = scmp.ne.s32.totalorder %s249, %s252
      %p261 = scmp.eq.s32.totalorder %s33, 1
      %p262 = por %p260, %p261
      %p263 = scmp.ne.s32.totalorder %s252, %s253
      %p264 = scmp.eq.s32.totalorder %s33, 0
      %p265 = por %p263, %p264
      %p266 = scmp.ne.s32.totalorder %s252, %s253
      %p267 = scmp.eq.s32.totalorder %s34, 1
      %p268 = por %p266, %p267
      %p270 = scmp.ne.s32.totalorder %s253, %s269
      %p271 = scmp.eq.s32.totalorder %s34, 0
      %p272 = por %p270, %p271
      %p273 = scmp.le.s32.totalorder 1, %s28
      %p274 = scmp.lt.s32.totalorder %s28, 3
      %p275 = pnand %p273, %p274
      %p276 = pneg %p275
      // Predicated region
      $region9: #{tpu_custom_call.1} parent=5 // pred_check
        _
      $region10: #{tpu_custom_call.1} parent=5 // pred_check_branch
        %278 = sbr.rel (%p275) target = $region12
      $region11: #{tpu_custom_call.1} parent=5 // pred_region
        %s279 = ssub.s32 %s28, 1
        // Predicated region
        $region13: #{tpu_custom_call.1} parent=11 // pred_check
          %p280 = pneg %p167
        $region14: #{tpu_custom_call.1} parent=11 // pred_check_branch
          %282 = sbr.rel (%p280) target = $region16
        $region15: #{tpu_custom_call.1} parent=11 // pred_region
          %s284 = ssub.s32 1536, 1536
          %285 = vsyncadd [#allocation9], %s284
          %s286 = sshll.u32 [#allocation8], 4
          %s287 = int_to_ptr.vmem [resolvable:$true] %s286
          %292 = dma.hbm_to_vmem [thread:$0]  %s4, 1536, %s287, [#allocation9], 128, 128, 8
        $region16: #{tpu_custom_call.1} parent=11 // pred_fallthru
          _
        // Predicated region
        $region17: #{tpu_custom_call.1} parent=11 // pred_check
          %p293 = pneg %p188
        $region18: #{tpu_custom_call.1} parent=11 // pred_check_branch
          %295 = sbr.rel (%p293) target = $region20
        $region19: #{tpu_custom_call.1} parent=11 // pred_region
          %s297 = ssub.s32 512, 512
          %298 = vsyncadd [#allocation9], %s297
          %s299 = sshll.u32 [#allocation10], 4
          %s300 = int_to_ptr.vmem [resolvable:$true] %s299
          %305 = dma.hbm_to_vmem [thread:$0]  %s5, 512, %s300, [#allocation9], 128, 128, 8
        $region20: #{tpu_custom_call.1} parent=11 // pred_fallthru
          _
        // Predicated region
        $region21: #{tpu_custom_call.1} parent=11 // pred_check
          %p306 = pneg %p209
        $region22: #{tpu_custom_call.1} parent=11 // pred_check_branch
          %308 = sbr.rel (%p306) target = $region24
        $region23: #{tpu_custom_call.1} parent=11 // pred_region
          _
        $region24: #{tpu_custom_call.1} parent=11 // pred_fallthru
          _
      $region12: #{tpu_custom_call.1} parent=5 // pred_fallthru
        _
      %p309 = scmp.lt.s32.totalorder %s28, 2
      // Predicated region
      $region25: #{tpu_custom_call.1} parent=5 // pred_check
        %p310 = pneg %p309
      $region26: #{tpu_custom_call.1} parent=5 // pred_check_branch
        %312 = sbr.rel (%p310) target = $region28
      $region27: #{tpu_custom_call.1} parent=5 // pred_region
        // Predicated region
        $region29: #{tpu_custom_call.1} parent=27 // pred_check
          %p313 = pneg %p62
        $region30: #{tpu_custom_call.1} parent=27 // pred_check_branch
          %315 = sbr.rel (%p313) target = $region32
        $region31: #{tpu_custom_call.1} parent=27 // pred_region
          %s316 = sand.u32 %s52, 1
          %s317 = scalar_lea.sflag [#allocation3], %s316
          %s318 = sand.u32 %s52, 1
          %s319 = smul.addr %s318, 8
          %s320 = scalar_lea.vmem [#allocation2], %s319
          %s322 = ssub.s32 128, 128
          %323 = vsyncadd %s317, %s322
          %s324 = sadd.s32 %s36, %s35
          %s325 = smul.addr %s324, 128
          %s326 = scalar_lea.hbm %s0, %s325
          %s328 = sshll.u32 %s320, 4
          %s329 = int_to_ptr.vmem [resolvable:$true] %s328
          %331 = dma.hbm_to_vmem [thread:$0]  %s326, 128, %s329, %s317
        $region32: #{tpu_custom_call.1} parent=27 // pred_fallthru
          _
        // Predicated region
        $region33: #{tpu_custom_call.1} parent=27 // pred_check
          %p332 = pneg %p88
        $region34: #{tpu_custom_call.1} parent=27 // pred_check_branch
          %334 = sbr.rel (%p332) target = $region36
        $region35: #{tpu_custom_call.1} parent=27 // pred_region
          %s335 = sand.u32 %s28, 1
          %s336 = scalar_lea.sflag [#allocation6], %s335
          %s337 = sand.u32 %s78, 1
          %s338 = smul.addr %s337, 8
          %s339 = scalar_lea.vmem [#allocation5], %s338
          %s341 = ssub.s32 128, 128
          %342 = vsyncadd %s336, %s341
          %s343 = smul.addr %s35, 128
          %s344 = scalar_lea.hbm %s1, %s343
          %s346 = sshll.u32 %s339, 4
          %s347 = int_to_ptr.vmem [resolvable:$true] %s346
          %349 = dma.hbm_to_vmem [thread:$0]  %s344, 128, %s347, %s336
        $region36: #{tpu_custom_call.1} parent=27 // pred_fallthru
          _
        // Predicated region
        $region37: #{tpu_custom_call.1} parent=27 // pred_check
          %p350 = pneg %p114
        $region38: #{tpu_custom_call.1} parent=27 // pred_check_branch
          %352 = sbr.rel (%p350) target = $region40
        $region39: #{tpu_custom_call.1} parent=27 // pred_region
          %s353 = sand.u32 %s28, 1
          %s354 = scalar_lea.sflag [#allocation6], %s353
          %s355 = sand.u32 %s104, 1
          %s356 = smul.addr %s355, 8
          %s357 = scalar_lea.vmem [#allocation7], %s356
          %s359 = ssub.s32 128, 128
          %360 = vsyncadd %s354, %s359
          %s361 = smul.addr %s35, 128
          %s362 = scalar_lea.hbm %s2, %s361
          %s364 = sshll.u32 %s357, 4
          %s365 = int_to_ptr.vmem [resolvable:$true] %s364
          %367 = dma.hbm_to_vmem [thread:$0]  %s362, 128, %s365, %s354
        $region40: #{tpu_custom_call.1} parent=27 // pred_fallthru
          _
        // Predicated region
        $region41: #{tpu_custom_call.1} parent=27 // pred_check
          %p368 = pneg %p140
        $region42: #{tpu_custom_call.1} parent=27 // pred_check_branch
          %370 = sbr.rel (%p368) target = $region44
        $region43: #{tpu_custom_call.1} parent=27 // pred_region
          %p371 = scmp.lt.s32.totalorder %s35, 1
          %s372 = scalar_select %p371, %s35, 1
          %s373 = scalar_lea.vmem %s3, %s372
        $region44: #{tpu_custom_call.1} parent=27 // pred_fallthru
          _
      $region28: #{tpu_custom_call.1} parent=5 // pred_fallthru
        _
      %p374 = scmp.le.s32.totalorder 1, %s28
      %p375 = scmp.lt.s32.totalorder %s28, 3
      %p376 = pnand %p374, %p375
      %p377 = pneg %p376
      // Predicated region
      $region45: #{tpu_custom_call.1} parent=5 // pred_check
        _
      $region46: #{tpu_custom_call.1} parent=5 // pred_check_branch
        %379 = sbr.rel (%p376) target = $region48
      $region47: #{tpu_custom_call.1} parent=5 // pred_region
        %s380 = ssub.s32 %s28, 1
        %s381 = sand.u32 %s55, 1
        %s382 = scalar_lea.sflag [#allocation3], %s381
        %s383 = sand.u32 %s55, 1
        %s384 = smul.addr %s383, 8
        %s385 = scalar_lea.vmem [#allocation2], %s384
        // Predicated region
        $region49: #{tpu_custom_call.1} parent=47 // pred_check
          %p386 = pneg %p68
        $region50: #{tpu_custom_call.1} parent=47 // pred_check_branch
          %388 = sbr.rel (%p386) target = $region52
        $region51: #{tpu_custom_call.1} parent=47 // pred_region
          %389 = dma.done %s382, 128
        $region52: #{tpu_custom_call.1} parent=47 // pred_fallthru
          _
        %s390 = sand.u32 %s33, 1
        %s391 = scalar_lea.sflag [#allocation6], %s390
        %s392 = sand.u32 %s81, 1
        %s393 = smul.addr %s392, 8
        %s394 = scalar_lea.vmem [#allocation5], %s393
        // Predicated region
        $region53: #{tpu_custom_call.1} parent=47 // pred_check
          %p395 = pneg %p94
        $region54: #{tpu_custom_call.1} parent=47 // pred_check_branch
          %397 = sbr.rel (%p395) target = $region56
        $region55: #{tpu_custom_call.1} parent=47 // pred_region
          %398 = dma.done %s391, 128
        $region56: #{tpu_custom_call.1} parent=47 // pred_fallthru
          _
        %s399 = sand.u32 %s33, 1
        %s400 = scalar_lea.sflag [#allocation6], %s399
        %s401 = sand.u32 %s107, 1
        %s402 = smul.addr %s401, 8
        %s403 = scalar_lea.vmem [#allocation7], %s402
        // Predicated region
        $region57: #{tpu_custom_call.1} parent=47 // pred_check
          %p404 = pneg %p120
        $region58: #{tpu_custom_call.1} parent=47 // pred_check_branch
          %406 = sbr.rel (%p404) target = $region60
        $region59: #{tpu_custom_call.1} parent=47 // pred_region
          %407 = dma.done %s400, 128
        $region60: #{tpu_custom_call.1} parent=47 // pred_fallthru
          _
        // Predicated region
        $region61: #{tpu_custom_call.1} parent=47 // pred_check
          %p408 = pneg %p167
        $region62: #{tpu_custom_call.1} parent=47 // pred_check_branch
          %410 = sbr.rel (%p408) target = $region64
        $region63: #{tpu_custom_call.1} parent=47 // pred_region
          %411 = dma.done [#allocation9], 1536
        $region64: #{tpu_custom_call.1} parent=47 // pred_fallthru
          _
        // Predicated region
        $region65: #{tpu_custom_call.1} parent=47 // pred_check
          %p412 = pneg %p188
        $region66: #{tpu_custom_call.1} parent=47 // pred_check_branch
          %414 = sbr.rel (%p412) target = $region68
        $region67: #{tpu_custom_call.1} parent=47 // pred_region
          %415 = dma.done [#allocation9], 512
        $region68: #{tpu_custom_call.1} parent=47 // pred_fallthru
          _
        %s416 = sand.u32 %s55, 1
        %s417 = scalar_lea.sflag [#allocation3], %s416
        %s418 = sand.u32 %s55, 1
        %s419 = smul.addr %s418, 8
        %s420 = scalar_lea.vmem [#allocation2], %s419
        %p421 = pneg %p68
        %p422 = pneg %p65
        %s423 = sand.u32 %s33, 1
        %s424 = scalar_lea.sflag [#allocation6], %s423
        %s425 = sand.u32 %s81, 1
        %s426 = smul.addr %s425, 8
        %s427 = scalar_lea.vmem [#allocation5], %s426
        %p428 = pneg %p94
        %p429 = pneg %p91
        %s430 = sand.u32 %s33, 1
        %s431 = scalar_lea.sflag [#allocation6], %s430
        %s432 = sand.u32 %s107, 1
        %s433 = smul.addr %s432, 8
        %s434 = scalar_lea.vmem [#allocation7], %s433
        %p435 = pneg %p120
        %p436 = pneg %p117
        %p437 = scmp.lt.s32.totalorder %s37, 1
        %s438 = scalar_select %p437, %s37, 1
        %s439 = scalar_lea.vmem %s3, %s438
        %p440 = pneg %p146
        %p441 = pneg %p143
        %p442 = pneg %p167
        %p443 = pneg %p164
        %p444 = pneg %p188
        %p445 = pneg %p185
        %p446 = pneg %p209
        %p447 = pneg %p206
        %p448 = pneg %p237
        %p449 = pneg %p234
        %s450 = sand.u32 %s224, 1
        %s451 = scalar_lea.sflag [#allocation4], %s450
        %s452 = sand.u32 %s224, 1
        %s453 = smul.addr %s452, 8
        %s454 = scalar_lea.vmem [#allocation11], %s453
        %p455 = pneg %p265
        %p456 = pneg %p262
        %s457 = sand.u32 %s252, 1
        %s458 = scalar_lea.sflag [#allocation13], %s457
        %s459 = sand.u32 %s252, 1
        %s460 = smul.addr %s459, 64
        %s461 = scalar_lea.vmem [#allocation12], %s460
        %p462 = scmp.lt.s32.totalorder %s37, 1
        %s463 = scalar_select %p462, %s37, 1
        %s464 = scalar_lea.vmem %s3, %s463
        %v465 = vld [vmem:[%s385] sm:$0xff]
        %v466 = vld [vmem:[#allocation8] sm:$0xff]
        %v467 = vld [vmem:[#allocation8 + $0x8] sm:$0xff]
        %v468 = vld [vmem:[#allocation8 + $0x10] sm:$0xff]
        %v469 = vld [vmem:[#allocation8 + $0x18] sm:$0xff]
        %v470 = vld [vmem:[%s6] sm:$0x1]
        %v472 = vlaneseq
        %v473 = vshrl.u32 %v472, 7
        %v474 = vsub.s32 0, %v473
        %v475 = vrot.slane %v470, %v474
        %vm477 = vcmask 261120
        %v479 = vsel %vm477, %v465, 0
        %481 = vmatprep.subr.mxu0 0.0
        %482 = vmatpush1.msra.mxu0 0.0
        %483 = vmatprep.subr.mxu0 0.0
        %484 = vmatpush1.msra.mxu0 0.0
        %485 = vmatprep.subr.mxu0 0.0
        %486 = vmatpush1.msra.mxu0 0.0
        %487 = vmatprep.subr.mxu0 0.0
        %488 = vmatpush1.msra.mxu0 0.0
        %489 = vmatprep.subr.mxu0 0.0
        %490 = vmatpush1.msra.mxu0 0.0
        %491 = vmatprep.subr.mxu0 0.0
        %492 = vmatpush1.msra.mxu0 0.0
        %493 = vmatprep.subr.mxu0 0.0
        %494 = vmatpush1.msra.mxu0 0.0
        %495 = vmatprep.subr.mxu0 0.0
        %496 = vmatpush1.msra.mxu0 0.0
        %497 = vmatprep.subr.mxu0 0.0
        %498 = vmatpush1.msra.mxu0 0.0
        %499 = vmatprep.subr.mxu0 0.0
        %500 = vmatpush1.msra.mxu0 0.0
        %501 = vmatprep.subr.mxu0 0.0
        %502 = vmatpush1.msra.mxu0 0.0
        %503 = vmatprep.subr.mxu0 0.0
        %504 = vmatpush1.msra.mxu0 0.0
        %505 = vmatprep.subr.mxu0 0.0
        %506 = vmatpush1.msra.mxu0 %v469
        %507 = vmatprep.subr.mxu0 0.0
        %508 = vmatpush1.msra.mxu0 %v468
        %509 = vmatprep.subr.mxu0 0.0
        %510 = vmatpush1.msra.mxu0 %v467
        %511 = vmatprep.subr.mxu0 0.0
        %512 = vmatpush1.msra.mxu0 %v466
        %513 = vmatprep.subr.mxu0 0.0
        %514 = vmatpush2.msra.mxu0 0.0
        %515 = vmatprep.subr.mxu0 0.0
        %516 = vmatpush2.msra.mxu0 0.0
        %517 = vmatprep.subr.mxu0 0.0
        %518 = vmatpush2.msra.mxu0 0.0
        %519 = vmatprep.subr.mxu0 0.0
        %520 = vmatpush2.msra.mxu0 0.0
        %521 = vmatprep.subr.mxu0 0.0
        %522 = vmatpush2.msra.mxu0 0.0
        %523 = vmatprep.subr.mxu0 0.0
        %524 = vmatpush2.msra.mxu0 0.0
        %525 = vmatprep.subr.mxu0 0.0
        %526 = vmatpush2.msra.mxu0 0.0
        %527 = vmatprep.subr.mxu0 0.0
        %528 = vmatpush2.msra.mxu0 0.0
        %529 = vmatprep.subr.mxu0 0.0
        %530 = vmatpush2.msra.mxu0 0.0
        %531 = vmatprep.subr.mxu0 0.0
        %532 = vmatpush2.msra.mxu0 0.0
        %533 = vmatprep.subr.mxu0 0.0
        %534 = vmatpush2.msra.mxu0 0.0
        %535 = vmatprep.subr.mxu0 0.0
        %536 = vmatpush2.msra.mxu0 0.0
        %537 = vmatprep.subr.mxu0 0.0
        %538 = vmatpush2.msra.mxu0 0.0
        %539 = vmatprep.subr.mxu0 0.0
        %540 = vmatpush2.msra.mxu0 0.0
        %541 = vmatprep.subr.mxu0 0.0
        %542 = vmatpush2.msra.mxu0 0.0
        %543 = vmatprep.subr.mxu0 0.0
        %544 = vmatpush2.msra.mxu0 0.0
        %545 = vmatprep.mubr.f32.mxu0 0.0
        %546 = vmatmul.mubr.f32.gmra.mxu0 %v479
        %v547 = vpop.f32.mrf.mxu0
        %v548 = vadd.f32 %v475, %v547
        %v549 = vpop.f32.mrf.mxu0
        %550 = vdwg.mxu0
        %v551 = vld [vmem:[%s394] sm:$0xff]
        %s552 = scalar_lea.vmem [#allocation8], 32
        %v553 = vld [vmem:[%s552] sm:$0xff]
        %v554 = vld [vmem:[%s552 + $0x8] sm:$0xff]
        %v555 = vld [vmem:[%s552 + $0x10] sm:$0xff]
        %v556 = vld [vmem:[%s552 + $0x18] sm:$0xff]
        %s557 = scalar_lea.vmem %s6, 1
        %v558 = vld [vmem:[%s557] sm:$0x1]
        %v560 = vlaneseq
        %v561 = vshrl.u32 %v560, 7
        %v562 = vsub.s32 0, %v561
        %v563 = vrot.slane %v558, %v562
        %v566 = vsel %vm477, %v551, 0
        %568 = vmatprep.subr.mxu0 0.0
        %569 = vmatpush1.msra.mxu0 0.0
        %570 = vmatprep.subr.mxu0 0.0
        %571 = vmatpush1.msra.mxu0 0.0
        %572 = vmatprep.subr.mxu0 0.0
        %573 = vmatpush1.msra.mxu0 0.0
        %574 = vmatprep.subr.mxu0 0.0
        %575 = vmatpush1.msra.mxu0 0.0
        %576 = vmatprep.subr.mxu0 0.0
        %577 = vmatpush1.msra.mxu0 0.0
        %578 = vmatprep.subr.mxu0 0.0
        %579 = vmatpush1.msra.mxu0 0.0
        %580 = vmatprep.subr.mxu0 0.0
        %581 = vmatpush1.msra.mxu0 0.0
        %582 = vmatprep.subr.mxu0 0.0
        %583 = vmatpush1.msra.mxu0 0.0
        %584 = vmatprep.subr.mxu0 0.0
        %585 = vmatpush1.msra.mxu0 0.0
        %586 = vmatprep.subr.mxu0 0.0
        %587 = vmatpush1.msra.mxu0 0.0
        %588 = vmatprep.subr.mxu0 0.0
        %589 = vmatpush1.msra.mxu0 0.0
        %590 = vmatprep.subr.mxu0 0.0
        %591 = vmatpush1.msra.mxu0 0.0
        %592 = vmatprep.subr.mxu0 0.0
        %593 = vmatpush1.msra.mxu0 %v556
        %594 = vmatprep.subr.mxu0 0.0
        %595 = vmatpush1.msra.mxu0 %v555
        %596 = vmatprep.subr.mxu0 0.0
        %597 = vmatpush1.msra.mxu0 %v554
        %598 = vmatprep.subr.mxu0 0.0
        %599 = vmatpush1.msra.mxu0 %v553
        %600 = vmatprep.subr.mxu0 0.0
        %601 = vmatpush2.msra.mxu0 0.0
        %602 = vmatprep.subr.mxu0 0.0
        %603 = vmatpush2.msra.mxu0 0.0
        %604 = vmatprep.subr.mxu0 0.0
        %605 = vmatpush2.msra.mxu0 0.0
        %606 = vmatprep.subr.mxu0 0.0
        %607 = vmatpush2.msra.mxu0 0.0
        %608 = vmatprep.subr.mxu0 0.0
        %609 = vmatpush2.msra.mxu0 0.0
        %610 = vmatprep.subr.mxu0 0.0
        %611 = vmatpush2.msra.mxu0 0.0
        %612 = vmatprep.subr.mxu0 0.0
        %613 = vmatpush2.msra.mxu0 0.0
        %614 = vmatprep.subr.mxu0 0.0
        %615 = vmatpush2.msra.mxu0 0.0
        %616 = vmatprep.subr.mxu0 0.0
        %617 = vmatpush2.msra.mxu0 0.0
        %618 = vmatprep.subr.mxu0 0.0
        %619 = vmatpush2.msra.mxu0 0.0
        %620 = vmatprep.subr.mxu0 0.0
        %621 = vmatpush2.msra.mxu0 0.0
        %622 = vmatprep.subr.mxu0 0.0
        %623 = vmatpush2.msra.mxu0 0.0
        %624 = vmatprep.subr.mxu0 0.0
        %625 = vmatpush2.msra.mxu0 0.0
        %626 = vmatprep.subr.mxu0 0.0
        %627 = vmatpush2.msra.mxu0 0.0
        %628 = vmatprep.subr.mxu0 0.0
        %629 = vmatpush2.msra.mxu0 0.0
        %630 = vmatprep.subr.mxu0 0.0
        %631 = vmatpush2.msra.mxu0 0.0
        %632 = vmatprep.mubr.f32.mxu0 0.0
        %633 = vmatmul.mubr.f32.gmra.mxu0 %v566
        %v634 = vpop.f32.mrf.mxu0
        %v635 = vadd.f32 %v563, %v634
        %v636 = vpop.f32.mrf.mxu0
        %637 = vdwg.mxu0
        %v638 = vld [vmem:[%s403] sm:$0xff]
        %s639 = scalar_lea.vmem [#allocation8], 64
        %v640 = vld [vmem:[%s639] sm:$0xff]
        %v641 = vld [vmem:[%s639 + $0x8] sm:$0xff]
        %v642 = vld [vmem:[%s639 + $0x10] sm:$0xff]
        %v643 = vld [vmem:[%s639 + $0x18] sm:$0xff]
        %s644 = scalar_lea.vmem %s6, 2
        %v645 = vld [vmem:[%s644] sm:$0x1]
        %v647 = vlaneseq
        %v648 = vshrl.u32 %v647, 7
        %v649 = vsub.s32 0, %v648
        %v650 = vrot.slane %v645, %v649
        %v653 = vsel %vm477, %v638, 0
        %655 = vmatprep.subr.mxu0 0.0
        %656 = vmatpush1.msra.mxu0 0.0
        %657 = vmatprep.subr.mxu0 0.0
        %658 = vmatpush1.msra.mxu0 0.0
        %659 = vmatprep.subr.mxu0 0.0
        %660 = vmatpush1.msra.mxu0 0.0
        %661 = vmatprep.subr.mxu0 0.0
        %662 = vmatpush1.msra.mxu0 0.0
        %663 = vmatprep.subr.mxu0 0.0
        %664 = vmatpush1.msra.mxu0 0.0
        %665 = vmatprep.subr.mxu0 0.0
        %666 = vmatpush1.msra.mxu0 0.0
        %667 = vmatprep.subr.mxu0 0.0
        %668 = vmatpush1.msra.mxu0 0.0
        %669 = vmatprep.subr.mxu0 0.0
        %670 = vmatpush1.msra.mxu0 0.0
        %671 = vmatprep.subr.mxu0 0.0
        %672 = vmatpush1.msra.mxu0 0.0
        %673 = vmatprep.subr.mxu0 0.0
        %674 = vmatpush1.msra.mxu0 0.0
        %675 = vmatprep.subr.mxu0 0.0
        %676 = vmatpush1.msra.mxu0 0.0
        %677 = vmatprep.subr.mxu0 0.0
        %678 = vmatpush1.msra.mxu0 0.0
        %679 = vmatprep.subr.mxu0 0.0
        %680 = vmatpush1.msra.mxu0 %v643
        %681 = vmatprep.subr.mxu0 0.0
        %682 = vmatpush1.msra.mxu0 %v642
        %683 = vmatprep.subr.mxu0 0.0
        %684 = vmatpush1.msra.mxu0 %v641
        %685 = vmatprep.subr.mxu0 0.0
        %686 = vmatpush1.msra.mxu0 %v640
        %687 = vmatprep.subr.mxu0 0.0
        %688 = vmatpush2.msra.mxu0 0.0
        %689 = vmatprep.subr.mxu0 0.0
        %690 = vmatpush2.msra.mxu0 0.0
        %691 = vmatprep.subr.mxu0 0.0
        %692 = vmatpush2.msra.mxu0 0.0
        %693 = vmatprep.subr.mxu0 0.0
        %694 = vmatpush2.msra.mxu0 0.0
        %695 = vmatprep.subr.mxu0 0.0
        %696 = vmatpush2.msra.mxu0 0.0
        %697 = vmatprep.subr.mxu0 0.0
        %698 = vmatpush2.msra.mxu0 0.0
        %699 = vmatprep.subr.mxu0 0.0
        %700 = vmatpush2.msra.mxu0 0.0
        %701 = vmatprep.subr.mxu0 0.0
        %702 = vmatpush2.msra.mxu0 0.0
        %703 = vmatprep.subr.mxu0 0.0
        %704 = vmatpush2.msra.mxu0 0.0
        %705 = vmatprep.subr.mxu0 0.0
        %706 = vmatpush2.msra.mxu0 0.0
        %707 = vmatprep.subr.mxu0 0.0
        %708 = vmatpush2.msra.mxu0 0.0
        %709 = vmatprep.subr.mxu0 0.0
        %710 = vmatpush2.msra.mxu0 0.0
        %711 = vmatprep.subr.mxu0 0.0
        %712 = vmatpush2.msra.mxu0 0.0
        %713 = vmatprep.subr.mxu0 0.0
        %714 = vmatpush2.msra.mxu0 0.0
        %715 = vmatprep.subr.mxu0 0.0
        %716 = vmatpush2.msra.mxu0 0.0
        %717 = vmatprep.subr.mxu0 0.0
        %718 = vmatpush2.msra.mxu0 0.0
        %719 = vmatprep.mubr.f32.mxu0 0.0
        %720 = vmatmul.mubr.f32.gmra.mxu0 %v653
        %v721 = vpop.f32.mrf.mxu0
        %v722 = vadd.f32 %v650, %v721
        %v723 = vpop.f32.mrf.mxu0
        %724 = vdwg.mxu0
        %726 = vrot.lane.b32.xlu0 %v548, 124
        %v727 = vpop.permute.xlu0 %726
        %728 = vrot.lane.b32.xlu0 %v548, 120
        %v729 = vpop.permute.xlu0 %728
        %730 = vrot.lane.b32.xlu0 %v548, 116
        %v731 = vpop.permute.xlu0 %730
        %732 = vrot.lane.b32.xlu0 %v548, 112
        %v733 = vpop.permute.xlu0 %732
        %734 = vrot.lane.b32.xlu0 %v548, 108
        %v735 = vpop.permute.xlu0 %734
        %736 = vrot.lane.b32.xlu0 %v548, 104
        %v737 = vpop.permute.xlu0 %736
        %738 = vrot.lane.b32.xlu0 %v548, 100
        %v739 = vpop.permute.xlu0 %738
        %741 = vrot.lane.b32.xlu0 %v635, 124
        %v742 = vpop.permute.xlu0 %741
        %743 = vrot.lane.b32.xlu0 %v635, 120
        %v744 = vpop.permute.xlu0 %743
        %745 = vrot.lane.b32.xlu0 %v635, 116
        %v746 = vpop.permute.xlu0 %745
        %747 = vrot.lane.b32.xlu0 %v635, 112
        %v748 = vpop.permute.xlu0 %747
        %749 = vrot.lane.b32.xlu0 %v635, 108
        %v750 = vpop.permute.xlu0 %749
        %751 = vrot.lane.b32.xlu0 %v635, 104
        %v752 = vpop.permute.xlu0 %751
        %753 = vrot.lane.b32.xlu0 %v635, 100
        %v754 = vpop.permute.xlu0 %753
        %756 = vrot.lane.b32.xlu0 %v722, 124
        %v757 = vpop.permute.xlu0 %756
        %759 = vrot.lane.b32.xlu0 %v722, 120
        %v760 = vpop.permute.xlu0 %759
        %762 = vrot.lane.b32.xlu0 %v722, 116
        %v763 = vpop.permute.xlu0 %762
        %765 = vrot.lane.b32.xlu0 %v722, 112
        %v766 = vpop.permute.xlu0 %765
        %768 = vrot.lane.b32.xlu0 %v722, 108
        %v769 = vpop.permute.xlu0 %768
        %771 = vrot.lane.b32.xlu0 %v722, 104
        %v772 = vpop.permute.xlu0 %771
        %774 = vrot.lane.b32.xlu0 %v722, 100
        %v775 = vpop.permute.xlu0 %774
        %vm777 = vcmask 31744
        %v778 = vsel %vm777, %v548, 0
        %v780 = vsel %vm777, %v635, 0
        %782 = vmatprep.subr.mxu0 0.0
        %783 = vmatpush1.xpose.msra.mxu0 0.0
        %784 = vmatprep.subr.mxu0 0.0
        %785 = vmatpush1.xpose.msra.mxu0 0.0
        %786 = vmatprep.subr.mxu0 0.0
        %787 = vmatpush1.xpose.msra.mxu0 0.0
        %788 = vmatprep.subr.mxu0 0.0
        %789 = vmatpush1.xpose.msra.mxu0 0.0
        %790 = vmatprep.subr.mxu0 0.0
        %791 = vmatpush1.xpose.msra.mxu0 0.0
        %792 = vmatprep.subr.mxu0 0.0
        %793 = vmatpush1.xpose.msra.mxu0 0.0
        %794 = vmatprep.subr.mxu0 0.0
        %795 = vmatpush1.xpose.msra.mxu0 0.0
        %796 = vmatprep.subr.mxu0 0.0
        %797 = vmatpush1.xpose.msra.mxu0 0.0
        %798 = vmatprep.subr.mxu0 0.0
        %799 = vmatpush1.xpose.msra.mxu0 0.0
        %800 = vmatprep.subr.mxu0 0.0
        %801 = vmatpush1.xpose.msra.mxu0 0.0
        %802 = vmatprep.subr.mxu0 0.0
        %803 = vmatpush1.xpose.msra.mxu0 0.0
        %804 = vmatprep.subr.mxu0 0.0
        %805 = vmatpush1.xpose.msra.mxu0 0.0
        %806 = vmatprep.subr.mxu0 0.0
        %807 = vmatpush1.xpose.msra.mxu0 0.0
        %808 = vmatprep.subr.mxu0 0.0
        %809 = vmatpush1.xpose.msra.mxu0 0.0
        %810 = vmatprep.subr.mxu0 0.0
        %811 = vmatpush1.xpose.msra.mxu0 0.0
        %812 = vmatprep.subr.mxu0 0.0
        %813 = vmatpush1.xpose.msra.mxu0 %v780
        %814 = vmatprep.subr.mxu0 0.0
        %815 = vmatpush2.xpose.msra.mxu0 0.0
        %816 = vmatprep.subr.mxu0 0.0
        %817 = vmatpush2.xpose.msra.mxu0 0.0
        %818 = vmatprep.subr.mxu0 0.0
        %819 = vmatpush2.xpose.msra.mxu0 0.0
        %820 = vmatprep.subr.mxu0 0.0
        %821 = vmatpush2.xpose.msra.mxu0 0.0
        %822 = vmatprep.subr.mxu0 0.0
        %823 = vmatpush2.xpose.msra.mxu0 0.0
        %824 = vmatprep.subr.mxu0 0.0
        %825 = vmatpush2.xpose.msra.mxu0 0.0
        %826 = vmatprep.subr.mxu0 0.0
        %827 = vmatpush2.xpose.msra.mxu0 0.0
        %828 = vmatprep.subr.mxu0 0.0
        %829 = vmatpush2.xpose.msra.mxu0 0.0
        %830 = vmatprep.subr.mxu0 0.0
        %831 = vmatpush2.xpose.msra.mxu0 0.0
        %832 = vmatprep.subr.mxu0 0.0
        %833 = vmatpush2.xpose.msra.mxu0 0.0
        %834 = vmatprep.subr.mxu0 0.0
        %835 = vmatpush2.xpose.msra.mxu0 0.0
        %836 = vmatprep.subr.mxu0 0.0
        %837 = vmatpush2.xpose.msra.mxu0 0.0
        %838 = vmatprep.subr.mxu0 0.0
        %839 = vmatpush2.xpose.msra.mxu0 0.0
        %840 = vmatprep.subr.mxu0 0.0
        %841 = vmatpush2.xpose.msra.mxu0 0.0
        %842 = vmatprep.subr.mxu0 0.0
        %843 = vmatpush2.xpose.msra.mxu0 0.0
        %844 = vmatprep.subr.mxu0 0.0
        %845 = vmatpush2.xpose.msra.mxu0 0.0
        %846 = vmatprep.mubr.f32.mxu0 0.0
        %847 = vmatmul.mubr.f32.gmra.mxu0 %v778
        %v848 = vpop.f32.mrf.mxu0
        %v849 = vadd.f32 0.0, %v848
        %v850 = vpop.f32.mrf.mxu0
        %851 = vdwg.mxu0
        %v852 = vsel %vm777, %v727, 0
        %v854 = vsel %vm777, %v742, 0
        %856 = vmatprep.subr.mxu0 0.0
        %857 = vmatpush1.xpose.msra.mxu0 0.0
        %858 = vmatprep.subr.mxu0 0.0
        %859 = vmatpush1.xpose.msra.mxu0 0.0
        %860 = vmatprep.subr.mxu0 0.0
        %861 = vmatpush1.xpose.msra.mxu0 0.0
        %862 = vmatprep.subr.mxu0 0.0
        %863 = vmatpush1.xpose.msra.mxu0 0.0
        %864 = vmatprep.subr.mxu0 0.0
        %865 = vmatpush1.xpose.msra.mxu0 0.0
        %866 = vmatprep.subr.mxu0 0.0
        %867 = vmatpush1.xpose.msra.mxu0 0.0
        %868 = vmatprep.subr.mxu0 0.0
        %869 = vmatpush1.xpose.msra.mxu0 0.0
        %870 = vmatprep.subr.mxu0 0.0
        %871 = vmatpush1.xpose.msra.mxu0 0.0
        %872 = vmatprep.subr.mxu0 0.0
        %873 = vmatpush1.xpose.msra.mxu0 0.0
        %874 = vmatprep.subr.mxu0 0.0
        %875 = vmatpush1.xpose.msra.mxu0 0.0
        %876 = vmatprep.subr.mxu0 0.0
        %877 = vmatpush1.xpose.msra.mxu0 0.0
        %878 = vmatprep.subr.mxu0 0.0
        %879 = vmatpush1.xpose.msra.mxu0 0.0
        %880 = vmatprep.subr.mxu0 0.0
        %881 = vmatpush1.xpose.msra.mxu0 0.0
        %882 = vmatprep.subr.mxu0 0.0
        %883 = vmatpush1.xpose.msra.mxu0 0.0
        %884 = vmatprep.subr.mxu0 0.0
        %885 = vmatpush1.xpose.msra.mxu0 0.0
        %886 = vmatprep.subr.mxu0 0.0
        %887 = vmatpush1.xpose.msra.mxu0 %v854
        %888 = vmatprep.subr.mxu0 0.0
        %889 = vmatpush2.xpose.msra.mxu0 0.0
        %890 = vmatprep.subr.mxu0 0.0
        %891 = vmatpush2.xpose.msra.mxu0 0.0
        %892 = vmatprep.subr.mxu0 0.0
        %893 = vmatpush2.xpose.msra.mxu0 0.0
        %894 = vmatprep.subr.mxu0 0.0
        %895 = vmatpush2.xpose.msra.mxu0 0.0
        %896 = vmatprep.subr.mxu0 0.0
        %897 = vmatpush2.xpose.msra.mxu0 0.0
        %898 = vmatprep.subr.mxu0 0.0
        %899 = vmatpush2.xpose.msra.mxu0 0.0
        %900 = vmatprep.subr.mxu0 0.0
        %901 = vmatpush2.xpose.msra.mxu0 0.0
        %902 = vmatprep.subr.mxu0 0.0
        %903 = vmatpush2.xpose.msra.mxu0 0.0
        %904 = vmatprep.subr.mxu0 0.0
        %905 = vmatpush2.xpose.msra.mxu0 0.0
        %906 = vmatprep.subr.mxu0 0.0
        %907 = vmatpush2.xpose.msra.mxu0 0.0
        %908 = vmatprep.subr.mxu0 0.0
        %909 = vmatpush2.xpose.msra.mxu0 0.0
        %910 = vmatprep.subr.mxu0 0.0
        %911 = vmatpush2.xpose.msra.mxu0 0.0
        %912 = vmatprep.subr.mxu0 0.0
        %913 = vmatpush2.xpose.msra.mxu0 0.0
        %914 = vmatprep.subr.mxu0 0.0
        %915 = vmatpush2.xpose.msra.mxu0 0.0
        %916 = vmatprep.subr.mxu0 0.0
        %917 = vmatpush2.xpose.msra.mxu0 0.0
        %918 = vmatprep.subr.mxu0 0.0
        %919 = vmatpush2.xpose.msra.mxu0 0.0
        %920 = vmatprep.mubr.f32.mxu0 0.0
        %921 = vmatmul.mubr.f32.gmra.mxu0 %v852
        %v922 = vpop.f32.mrf.mxu0
        %v923 = vadd.f32 0.0, %v922
        %v924 = vpop.f32.mrf.mxu0
        %925 = vdwg.mxu0
        %v926 = vsel %vm777, %v729, 0
        %v928 = vsel %vm777, %v744, 0
        %930 = vmatprep.subr.mxu0 0.0
        %931 = vmatpush1.xpose.msra.mxu0 0.0
        %932 = vmatprep.subr.mxu0 0.0
        %933 = vmatpush1.xpose.msra.mxu0 0.0
        %934 = vmatprep.subr.mxu0 0.0
        %935 = vmatpush1.xpose.msra.mxu0 0.0
        %936 = vmatprep.subr.mxu0 0.0
        %937 = vmatpush1.xpose.msra.mxu0 0.0
        %938 = vmatprep.subr.mxu0 0.0
        %939 = vmatpush1.xpose.msra.mxu0 0.0
        %940 = vmatprep.subr.mxu0 0.0
        %941 = vmatpush1.xpose.msra.mxu0 0.0
        %942 = vmatprep.subr.mxu0 0.0
        %943 = vmatpush1.xpose.msra.mxu0 0.0
        %944 = vmatprep.subr.mxu0 0.0
        %945 = vmatpush1.xpose.msra.mxu0 0.0
        %946 = vmatprep.subr.mxu0 0.0
        %947 = vmatpush1.xpose.msra.mxu0 0.0
        %948 = vmatprep.subr.mxu0 0.0
        %949 = vmatpush1.xpose.msra.mxu0 0.0
        %950 = vmatprep.subr.mxu0 0.0
        %951 = vmatpush1.xpose.msra.mxu0 0.0
        %952 = vmatprep.subr.mxu0 0.0
        %953 = vmatpush1.xpose.msra.mxu0 0.0
        %954 = vmatprep.subr.mxu0 0.0
        %955 = vmatpush1.xpose.msra.mxu0 0.0
        %956 = vmatprep.subr.mxu0 0.0
        %957 = vmatpush1.xpose.msra.mxu0 0.0
        %958 = vmatprep.subr.mxu0 0.0
        %959 = vmatpush1.xpose.msra.mxu0 0.0
        %960 = vmatprep.subr.mxu0 0.0
        %961 = vmatpush1.xpose.msra.mxu0 %v928
        %962 = vmatprep.subr.mxu0 0.0
        %963 = vmatpush2.xpose.msra.mxu0 0.0
        %964 = vmatprep.subr.mxu0 0.0
        %965 = vmatpush2.xpose.msra.mxu0 0.0
        %966 = vmatprep.subr.mxu0 0.0
        %967 = vmatpush2.xpose.msra.mxu0 0.0
        %968 = vmatprep.subr.mxu0 0.0
        %969 = vmatpush2.xpose.msra.mxu0 0.0
        %970 = vmatprep.subr.mxu0 0.0
        %971 = vmatpush2.xpose.msra.mxu0 0.0
        %972 = vmatprep.subr.mxu0 0.0
        %973 = vmatpush2.xpose.msra.mxu0 0.0
        %974 = vmatprep.subr.mxu0 0.0
        %975 = vmatpush2.xpose.msra.mxu0 0.0
        %976 = vmatprep.subr.mxu0 0.0
        %977 = vmatpush2.xpose.msra.mxu0 0.0
        %978 = vmatprep.subr.mxu0 0.0
        %979 = vmatpush2.xpose.msra.mxu0 0.0
        %980 = vmatprep.subr.mxu0 0.0
        %981 = vmatpush2.xpose.msra.mxu0 0.0
        %982 = vmatprep.subr.mxu0 0.0
        %983 = vmatpush2.xpose.msra.mxu0 0.0
        %984 = vmatprep.subr.mxu0 0.0
        %985 = vmatpush2.xpose.msra.mxu0 0.0
        %986 = vmatprep.subr.mxu0 0.0
        %987 = vmatpush2.xpose.msra.mxu0 0.0
        %988 = vmatprep.subr.mxu0 0.0
        %989 = vmatpush2.xpose.msra.mxu0 0.0
        %990 = vmatprep.subr.mxu0 0.0
        %991 = vmatpush2.xpose.msra.mxu0 0.0
        %992 = vmatprep.subr.mxu0 0.0
        %993 = vmatpush2.xpose.msra.mxu0 0.0
        %994 = vmatprep.mubr.f32.mxu0 0.0
        %995 = vmatmul.mubr.f32.gmra.mxu0 %v926
        %v996 = vpop.f32.mrf.mxu0
        %v997 = vadd.f32 0.0, %v996
        %v998 = vpop.f32.mrf.mxu0
        %999 = vdwg.mxu0
        %v1000 = vsel %vm777, %v731, 0
        %v1002 = vsel %vm777, %v746, 0
        %1004 = vmatprep.subr.mxu0 0.0
        %1005 = vmatpush1.xpose.msra.mxu0 0.0
        %1006 = vmatprep.subr.mxu0 0.0
        %1007 = vmatpush1.xpose.msra.mxu0 0.0
        %1008 = vmatprep.subr.mxu0 0.0
        %1009 = vmatpush1.xpose.msra.mxu0 0.0
        %1010 = vmatprep.subr.mxu0 0.0
        %1011 = vmatpush1.xpose.msra.mxu0 0.0
        %1012 = vmatprep.subr.mxu0 0.0
        %1013 = vmatpush1.xpose.msra.mxu0 0.0
        %1014 = vmatprep.subr.mxu0 0.0
        %1015 = vmatpush1.xpose.msra.mxu0 0.0
        %1016 = vmatprep.subr.mxu0 0.0
        %1017 = vmatpush1.xpose.msra.mxu0 0.0
        %1018 = vmatprep.subr.mxu0 0.0
        %1019 = vmatpush1.xpose.msra.mxu0 0.0
        %1020 = vmatprep.subr.mxu0 0.0
        %1021 = vmatpush1.xpose.msra.mxu0 0.0
        %1022 = vmatprep.subr.mxu0 0.0
        %1023 = vmatpush1.xpose.msra.mxu0 0.0
        %1024 = vmatprep.subr.mxu0 0.0
        %1025 = vmatpush1.xpose.msra.mxu0 0.0
        %1026 = vmatprep.subr.mxu0 0.0
        %1027 = vmatpush1.xpose.msra.mxu0 0.0
        %1028 = vmatprep.subr.mxu0 0.0
        %1029 = vmatpush1.xpose.msra.mxu0 0.0
        %1030 = vmatprep.subr.mxu0 0.0
        %1031 = vmatpush1.xpose.msra.mxu0 0.0
        %1032 = vmatprep.subr.mxu0 0.0
        %1033 = vmatpush1.xpose.msra.mxu0 0.0
        %1034 = vmatprep.subr.mxu0 0.0
        %1035 = vmatpush1.xpose.msra.mxu0 %v1002
        %1036 = vmatprep.subr.mxu0 0.0
        %1037 = vmatpush2.xpose.msra.mxu0 0.0
        %1038 = vmatprep.subr.mxu0 0.0
        %1039 = vmatpush2.xpose.msra.mxu0 0.0
        %1040 = vmatprep.subr.mxu0 0.0
        %1041 = vmatpush2.xpose.msra.mxu0 0.0
        %1042 = vmatprep.subr.mxu0 0.0
        %1043 = vmatpush2.xpose.msra.mxu0 0.0
        %1044 = vmatprep.subr.mxu0 0.0
        %1045 = vmatpush2.xpose.msra.mxu0 0.0
        %1046 = vmatprep.subr.mxu0 0.0
        %1047 = vmatpush2.xpose.msra.mxu0 0.0
        %1048 = vmatprep.subr.mxu0 0.0
        %1049 = vmatpush2.xpose.msra.mxu0 0.0
        %1050 = vmatprep.subr.mxu0 0.0
        %1051 = vmatpush2.xpose.msra.mxu0 0.0
        %1052 = vmatprep.subr.mxu0 0.0
        %1053 = vmatpush2.xpose.msra.mxu0 0.0
        %1054 = vmatprep.subr.mxu0 0.0
        %1055 = vmatpush2.xpose.msra.mxu0 0.0
        %1056 = vmatprep.subr.mxu0 0.0
        %1057 = vmatpush2.xpose.msra.mxu0 0.0
        %1058 = vmatprep.subr.mxu0 0.0
        %1059 = vmatpush2.xpose.msra.mxu0 0.0
        %1060 = vmatprep.subr.mxu0 0.0
        %1061 = vmatpush2.xpose.msra.mxu0 0.0
        %1062 = vmatprep.subr.mxu0 0.0
        %1063 = vmatpush2.xpose.msra.mxu0 0.0
        %1064 = vmatprep.subr.mxu0 0.0
        %1065 = vmatpush2.xpose.msra.mxu0 0.0
        %1066 = vmatprep.subr.mxu0 0.0
        %1067 = vmatpush2.xpose.msra.mxu0 0.0
        %1068 = vmatprep.mubr.f32.mxu0 0.0
        %1069 = vmatmul.mubr.f32.gmra.mxu0 %v1000
        %v1070 = vpop.f32.mrf.mxu0
        %v1071 = vadd.f32 0.0, %v1070
        %v1072 = vpop.f32.mrf.mxu0
        %1073 = vdwg.mxu0
        %v1074 = vsel %vm777, %v733, 0
        %v1076 = vsel %vm777, %v748, 0
        %1078 = vmatprep.subr.mxu0 0.0
        %1079 = vmatpush1.xpose.msra.mxu0 0.0
        %1080 = vmatprep.subr.mxu0 0.0
        %1081 = vmatpush1.xpose.msra.mxu0 0.0
        %1082 = vmatprep.subr.mxu0 0.0
        %1083 = vmatpush1.xpose.msra.mxu0 0.0
        %1084 = vmatprep.subr.mxu0 0.0
        %1085 = vmatpush1.xpose.msra.mxu0 0.0
        %1086 = vmatprep.subr.mxu0 0.0
        %1087 = vmatpush1.xpose.msra.mxu0 0.0
        %1088 = vmatprep.subr.mxu0 0.0
        %1089 = vmatpush1.xpose.msra.mxu0 0.0
        %1090 = vmatprep.subr.mxu0 0.0
        %1091 = vmatpush1.xpose.msra.mxu0 0.0
        %1092 = vmatprep.subr.mxu0 0.0
        %1093 = vmatpush1.xpose.msra.mxu0 0.0
        %1094 = vmatprep.subr.mxu0 0.0
        %1095 = vmatpush1.xpose.msra.mxu0 0.0
        %1096 = vmatprep.subr.mxu0 0.0
        %1097 = vmatpush1.xpose.msra.mxu0 0.0
        %1098 = vmatprep.subr.mxu0 0.0
        %1099 = vmatpush1.xpose.msra.mxu0 0.0
        %1100 = vmatprep.subr.mxu0 0.0
        %1101 = vmatpush1.xpose.msra.mxu0 0.0
        %1102 = vmatprep.subr.mxu0 0.0
        %1103 = vmatpush1.xpose.msra.mxu0 0.0
        %1104 = vmatprep.subr.mxu0 0.0
        %1105 = vmatpush1.xpose.msra.mxu0 0.0
        %1106 = vmatprep.subr.mxu0 0.0
        %1107 = vmatpush1.xpose.msra.mxu0 0.0
        %1108 = vmatprep.subr.mxu0 0.0
        %1109 = vmatpush1.xpose.msra.mxu0 %v1076
        %1110 = vmatprep.subr.mxu0 0.0
        %1111 = vmatpush2.xpose.msra.mxu0 0.0
        %1112 = vmatprep.subr.mxu0 0.0
        %1113 = vmatpush2.xpose.msra.mxu0 0.0
        %1114 = vmatprep.subr.mxu0 0.0
        %1115 = vmatpush2.xpose.msra.mxu0 0.0
        %1116 = vmatprep.subr.mxu0 0.0
        %1117 = vmatpush2.xpose.msra.mxu0 0.0
        %1118 = vmatprep.subr.mxu0 0.0
        %1119 = vmatpush2.xpose.msra.mxu0 0.0
        %1120 = vmatprep.subr.mxu0 0.0
        %1121 = vmatpush2.xpose.msra.mxu0 0.0
        %1122 = vmatprep.subr.mxu0 0.0
        %1123 = vmatpush2.xpose.msra.mxu0 0.0
        %1124 = vmatprep.subr.mxu0 0.0
        %1125 = vmatpush2.xpose.msra.mxu0 0.0
        %1126 = vmatprep.subr.mxu0 0.0
        %1127 = vmatpush2.xpose.msra.mxu0 0.0
        %1128 = vmatprep.subr.mxu0 0.0
        %1129 = vmatpush2.xpose.msra.mxu0 0.0
        %1130 = vmatprep.subr.mxu0 0.0
        %1131 = vmatpush2.xpose.msra.mxu0 0.0
        %1132 = vmatprep.subr.mxu0 0.0
        %1133 = vmatpush2.xpose.msra.mxu0 0.0
        %1134 = vmatprep.subr.mxu0 0.0
        %1135 = vmatpush2.xpose.msra.mxu0 0.0
        %1136 = vmatprep.subr.mxu0 0.0
        %1137 = vmatpush2.xpose.msra.mxu0 0.0
        %1138 = vmatprep.subr.mxu0 0.0
        %1139 = vmatpush2.xpose.msra.mxu0 0.0
        %1140 = vmatprep.subr.mxu0 0.0
        %1141 = vmatpush2.xpose.msra.mxu0 0.0
        %1142 = vmatprep.mubr.f32.mxu0 0.0
        %1143 = vmatmul.mubr.f32.gmra.mxu0 %v1074
        %v1144 = vpop.f32.mrf.mxu0
        %v1145 = vadd.f32 0.0, %v1144
        %v1146 = vpop.f32.mrf.mxu0
        %1147 = vdwg.mxu0
        %v1148 = vsel %vm777, %v735, 0
        %v1150 = vsel %vm777, %v750, 0
        %1152 = vmatprep.subr.mxu0 0.0
        %1153 = vmatpush1.xpose.msra.mxu0 0.0
        %1154 = vmatprep.subr.mxu0 0.0
        %1155 = vmatpush1.xpose.msra.mxu0 0.0
        %1156 = vmatprep.subr.mxu0 0.0
        %1157 = vmatpush1.xpose.msra.mxu0 0.0
        %1158 = vmatprep.subr.mxu0 0.0
        %1159 = vmatpush1.xpose.msra.mxu0 0.0
        %1160 = vmatprep.subr.mxu0 0.0
        %1161 = vmatpush1.xpose.msra.mxu0 0.0
        %1162 = vmatprep.subr.mxu0 0.0
        %1163 = vmatpush1.xpose.msra.mxu0 0.0
        %1164 = vmatprep.subr.mxu0 0.0
        %1165 = vmatpush1.xpose.msra.mxu0 0.0
        %1166 = vmatprep.subr.mxu0 0.0
        %1167 = vmatpush1.xpose.msra.mxu0 0.0
        %1168 = vmatprep.subr.mxu0 0.0
        %1169 = vmatpush1.xpose.msra.mxu0 0.0
        %1170 = vmatprep.subr.mxu0 0.0
        %1171 = vmatpush1.xpose.msra.mxu0 0.0
        %1172 = vmatprep.subr.mxu0 0.0
        %1173 = vmatpush1.xpose.msra.mxu0 0.0
        %1174 = vmatprep.subr.mxu0 0.0
        %1175 = vmatpush1.xpose.msra.mxu0 0.0
        %1176 = vmatprep.subr.mxu0 0.0
        %1177 = vmatpush1.xpose.msra.mxu0 0.0
        %1178 = vmatprep.subr.mxu0 0.0
        %1179 = vmatpush1.xpose.msra.mxu0 0.0
        %1180 = vmatprep.subr.mxu0 0.0
        %1181 = vmatpush1.xpose.msra.mxu0 0.0
        %1182 = vmatprep.subr.mxu0 0.0
        %1183 = vmatpush1.xpose.msra.mxu0 %v1150
        %1184 = vmatprep.subr.mxu0 0.0
        %1185 = vmatpush2.xpose.msra.mxu0 0.0
        %1186 = vmatprep.subr.mxu0 0.0
        %1187 = vmatpush2.xpose.msra.mxu0 0.0
        %1188 = vmatprep.subr.mxu0 0.0
        %1189 = vmatpush2.xpose.msra.mxu0 0.0
        %1190 = vmatprep.subr.mxu0 0.0
        %1191 = vmatpush2.xpose.msra.mxu0 0.0
        %1192 = vmatprep.subr.mxu0 0.0
        %1193 = vmatpush2.xpose.msra.mxu0 0.0
        %1194 = vmatprep.subr.mxu0 0.0
        %1195 = vmatpush2.xpose.msra.mxu0 0.0
        %1196 = vmatprep.subr.mxu0 0.0
        %1197 = vmatpush2.xpose.msra.mxu0 0.0
        %1198 = vmatprep.subr.mxu0 0.0
        %1199 = vmatpush2.xpose.msra.mxu0 0.0
        %1200 = vmatprep.subr.mxu0 0.0
        %1201 = vmatpush2.xpose.msra.mxu0 0.0
        %1202 = vmatprep.subr.mxu0 0.0
        %1203 = vmatpush2.xpose.msra.mxu0 0.0
        %1204 = vmatprep.subr.mxu0 0.0
        %1205 = vmatpush2.xpose.msra.mxu0 0.0
        %1206 = vmatprep.subr.mxu0 0.0
        %1207 = vmatpush2.xpose.msra.mxu0 0.0
        %1208 = vmatprep.subr.mxu0 0.0
        %1209 = vmatpush2.xpose.msra.mxu0 0.0
        %1210 = vmatprep.subr.mxu0 0.0
        %1211 = vmatpush2.xpose.msra.mxu0 0.0
        %1212 = vmatprep.subr.mxu0 0.0
        %1213 = vmatpush2.xpose.msra.mxu0 0.0
        %1214 = vmatprep.subr.mxu0 0.0
        %1215 = vmatpush2.xpose.msra.mxu0 0.0
        %1216 = vmatprep.mubr.f32.mxu0 0.0
        %1217 = vmatmul.mubr.f32.gmra.mxu0 %v1148
        %v1218 = vpop.f32.mrf.mxu0
        %v1219 = vadd.f32 0.0, %v1218
        %v1220 = vpop.f32.mrf.mxu0
        %1221 = vdwg.mxu0
        %v1222 = vsel %vm777, %v737, 0
        %v1224 = vsel %vm777, %v752, 0
        %1226 = vmatprep.subr.mxu0 0.0
        %1227 = vmatpush1.xpose.msra.mxu0 0.0
        %1228 = vmatprep.subr.mxu0 0.0
        %1229 = vmatpush1.xpose.msra.mxu0 0.0
        %1230 = vmatprep.subr.mxu0 0.0
        %1231 = vmatpush1.xpose.msra.mxu0 0.0
        %1232 = vmatprep.subr.mxu0 0.0
        %1233 = vmatpush1.xpose.msra.mxu0 0.0
        %1234 = vmatprep.subr.mxu0 0.0
        %1235 = vmatpush1.xpose.msra.mxu0 0.0
        %1236 = vmatprep.subr.mxu0 0.0
        %1237 = vmatpush1.xpose.msra.mxu0 0.0
        %1238 = vmatprep.subr.mxu0 0.0
        %1239 = vmatpush1.xpose.msra.mxu0 0.0
        %1240 = vmatprep.subr.mxu0 0.0
        %1241 = vmatpush1.xpose.msra.mxu0 0.0
        %1242 = vmatprep.subr.mxu0 0.0
        %1243 = vmatpush1.xpose.msra.mxu0 0.0
        %1244 = vmatprep.subr.mxu0 0.0
        %1245 = vmatpush1.xpose.msra.mxu0 0.0
        %1246 = vmatprep.subr.mxu0 0.0
        %1247 = vmatpush1.xpose.msra.mxu0 0.0
        %1248 = vmatprep.subr.mxu0 0.0
        %1249 = vmatpush1.xpose.msra.mxu0 0.0
        %1250 = vmatprep.subr.mxu0 0.0
        %1251 = vmatpush1.xpose.msra.mxu0 0.0
        %1252 = vmatprep.subr.mxu0 0.0
        %1253 = vmatpush1.xpose.msra.mxu0 0.0
        %1254 = vmatprep.subr.mxu0 0.0
        %1255 = vmatpush1.xpose.msra.mxu0 0.0
        %1256 = vmatprep.subr.mxu0 0.0
        %1257 = vmatpush1.xpose.msra.mxu0 %v1224
        %1258 = vmatprep.subr.mxu0 0.0
        %1259 = vmatpush2.xpose.msra.mxu0 0.0
        %1260 = vmatprep.subr.mxu0 0.0
        %1261 = vmatpush2.xpose.msra.mxu0 0.0
        %1262 = vmatprep.subr.mxu0 0.0
        %1263 = vmatpush2.xpose.msra.mxu0 0.0
        %1264 = vmatprep.subr.mxu0 0.0
        %1265 = vmatpush2.xpose.msra.mxu0 0.0
        %1266 = vmatprep.subr.mxu0 0.0
        %1267 = vmatpush2.xpose.msra.mxu0 0.0
        %1268 = vmatprep.subr.mxu0 0.0
        %1269 = vmatpush2.xpose.msra.mxu0 0.0
        %1270 = vmatprep.subr.mxu0 0.0
        %1271 = vmatpush2.xpose.msra.mxu0 0.0
        %1272 = vmatprep.subr.mxu0 0.0
        %1273 = vmatpush2.xpose.msra.mxu0 0.0
        %1274 = vmatprep.subr.mxu0 0.0
        %1275 = vmatpush2.xpose.msra.mxu0 0.0
        %1276 = vmatprep.subr.mxu0 0.0
        %1277 = vmatpush2.xpose.msra.mxu0 0.0
        %1278 = vmatprep.subr.mxu0 0.0
        %1279 = vmatpush2.xpose.msra.mxu0 0.0
        %1280 = vmatprep.subr.mxu0 0.0
        %1281 = vmatpush2.xpose.msra.mxu0 0.0
        %1282 = vmatprep.subr.mxu0 0.0
        %1283 = vmatpush2.xpose.msra.mxu0 0.0
        %1284 = vmatprep.subr.mxu0 0.0
        %1285 = vmatpush2.xpose.msra.mxu0 0.0
        %1286 = vmatprep.subr.mxu0 0.0
        %1287 = vmatpush2.xpose.msra.mxu0 0.0
        %1288 = vmatprep.subr.mxu0 0.0
        %1289 = vmatpush2.xpose.msra.mxu0 0.0
        %1290 = vmatprep.mubr.f32.mxu0 0.0
        %1291 = vmatmul.mubr.f32.gmra.mxu0 %v1222
        %v1292 = vpop.f32.mrf.mxu0
        %v1293 = vadd.f32 0.0, %v1292
        %v1294 = vpop.f32.mrf.mxu0
        %1295 = vdwg.mxu0
        %v1296 = vsel %vm777, %v739, 0
        %v1298 = vsel %vm777, %v754, 0
        %1300 = vmatprep.subr.mxu0 0.0
        %1301 = vmatpush1.xpose.msra.mxu0 0.0
        %1302 = vmatprep.subr.mxu0 0.0
        %1303 = vmatpush1.xpose.msra.mxu0 0.0
        %1304 = vmatprep.subr.mxu0 0.0
        %1305 = vmatpush1.xpose.msra.mxu0 0.0
        %1306 = vmatprep.subr.mxu0 0.0
        %1307 = vmatpush1.xpose.msra.mxu0 0.0
        %1308 = vmatprep.subr.mxu0 0.0
        %1309 = vmatpush1.xpose.msra.mxu0 0.0
        %1310 = vmatprep.subr.mxu0 0.0
        %1311 = vmatpush1.xpose.msra.mxu0 0.0
        %1312 = vmatprep.subr.mxu0 0.0
        %1313 = vmatpush1.xpose.msra.mxu0 0.0
        %1314 = vmatprep.subr.mxu0 0.0
        %1315 = vmatpush1.xpose.msra.mxu0 0.0
        %1316 = vmatprep.subr.mxu0 0.0
        %1317 = vmatpush1.xpose.msra.mxu0 0.0
        %1318 = vmatprep.subr.mxu0 0.0
        %1319 = vmatpush1.xpose.msra.mxu0 0.0
        %1320 = vmatprep.subr.mxu0 0.0
        %1321 = vmatpush1.xpose.msra.mxu0 0.0
        %1322 = vmatprep.subr.mxu0 0.0
        %1323 = vmatpush1.xpose.msra.mxu0 0.0
        %1324 = vmatprep.subr.mxu0 0.0
        %1325 = vmatpush1.xpose.msra.mxu0 0.0
        %1326 = vmatprep.subr.mxu0 0.0
        %1327 = vmatpush1.xpose.msra.mxu0 0.0
        %1328 = vmatprep.subr.mxu0 0.0
        %1329 = vmatpush1.xpose.msra.mxu0 0.0
        %1330 = vmatprep.subr.mxu0 0.0
        %1331 = vmatpush1.xpose.msra.mxu0 %v1298
        %1332 = vmatprep.subr.mxu0 0.0
        %1333 = vmatpush2.xpose.msra.mxu0 0.0
        %1334 = vmatprep.subr.mxu0 0.0
        %1335 = vmatpush2.xpose.msra.mxu0 0.0
        %1336 = vmatprep.subr.mxu0 0.0
        %1337 = vmatpush2.xpose.msra.mxu0 0.0
        %1338 = vmatprep.subr.mxu0 0.0
        %1339 = vmatpush2.xpose.msra.mxu0 0.0
        %1340 = vmatprep.subr.mxu0 0.0
        %1341 = vmatpush2.xpose.msra.mxu0 0.0
        %1342 = vmatprep.subr.mxu0 0.0
        %1343 = vmatpush2.xpose.msra.mxu0 0.0
        %1344 = vmatprep.subr.mxu0 0.0
        %1345 = vmatpush2.xpose.msra.mxu0 0.0
        %1346 = vmatprep.subr.mxu0 0.0
        %1347 = vmatpush2.xpose.msra.mxu0 0.0
        %1348 = vmatprep.subr.mxu0 0.0
        %1349 = vmatpush2.xpose.msra.mxu0 0.0
        %1350 = vmatprep.subr.mxu0 0.0
        %1351 = vmatpush2.xpose.msra.mxu0 0.0
        %1352 = vmatprep.subr.mxu0 0.0
        %1353 = vmatpush2.xpose.msra.mxu0 0.0
        %1354 = vmatprep.subr.mxu0 0.0
        %1355 = vmatpush2.xpose.msra.mxu0 0.0
        %1356 = vmatprep.subr.mxu0 0.0
        %1357 = vmatpush2.xpose.msra.mxu0 0.0
        %1358 = vmatprep.subr.mxu0 0.0
        %1359 = vmatpush2.xpose.msra.mxu0 0.0
        %1360 = vmatprep.subr.mxu0 0.0
        %1361 = vmatpush2.xpose.msra.mxu0 0.0
        %1362 = vmatprep.subr.mxu0 0.0
        %1363 = vmatpush2.xpose.msra.mxu0 0.0
        %1364 = vmatprep.mubr.f32.mxu0 0.0
        %1365 = vmatmul.mubr.f32.gmra.mxu0 %v1296
        %v1366 = vpop.f32.mrf.mxu0
        %v1367 = vadd.f32 0.0, %v1366
        %v1368 = vpop.f32.mrf.mxu0
        %1369 = vdwg.mxu0
        %v1370 = vld [vmem:[%s464] sm:$0x1]
        %v1372 = vlaneseq
        %v1373 = vshrl.u32 %v1372, 7
        %v1374 = vsub.s32 0, %v1373
        %v1375 = vrot.slane %v1370, %v1374
        %v1377 = vadd.f32 %v849, %v1375
        %v1378 = vadd.f32 %v923, %v1375
        %v1379 = vadd.f32 %v997, %v1375
        %v1380 = vadd.f32 %v1071, %v1375
        %v1381 = vadd.f32 %v1145, %v1375
        %v1382 = vadd.f32 %v1219, %v1375
        %v1383 = vadd.f32 %v1293, %v1375
        %v1384 = vadd.f32 %v1367, %v1375
        %vm1385 = vcmask 64512
        %v1386 = vsel %vm1385, %v1377, -inf
        %1387 = vmax.xlane.f32.xlu0 %v1386
        %v1388 = vpop.xlane.xlu0 %1387
        %v1389 = vsel %vm1385, %v1378, -inf
        %1390 = vmax.xlane.f32.xlu0 %v1389
        %v1391 = vpop.xlane.xlu0 %1390
        %v1392 = vsel %vm1385, %v1379, -inf
        %1393 = vmax.xlane.f32.xlu0 %v1392
        %v1394 = vpop.xlane.xlu0 %1393
        %v1395 = vsel %vm1385, %v1380, -inf
        %1396 = vmax.xlane.f32.xlu0 %v1395
        %v1397 = vpop.xlane.xlu0 %1396
        %v1398 = vsel %vm1385, %v1381, -inf
        %1399 = vmax.xlane.f32.xlu0 %v1398
        %v1400 = vpop.xlane.xlu0 %1399
        %v1401 = vsel %vm1385, %v1382, -inf
        %1402 = vmax.xlane.f32.xlu0 %v1401
        %v1403 = vpop.xlane.xlu0 %1402
        %v1404 = vsel %vm1385, %v1383, -inf
        %1405 = vmax.xlane.f32.xlu0 %v1404
        %v1406 = vpop.xlane.xlu0 %1405
        %v1407 = vsel %vm1385, %v1384, -inf
        %1408 = vmax.xlane.f32.xlu0 %v1407
        %v1409 = vpop.xlane.xlu0 %1408
        %v1410 = vsub.f32 %v1377, %v1388
        %v1411 = vsub.f32 %v1378, %v1391
        %v1412 = vsub.f32 %v1379, %v1394
        %v1413 = vsub.f32 %v1380, %v1397
        %v1414 = vsub.f32 %v1381, %v1400
        %v1415 = vsub.f32 %v1382, %v1403
        %v1416 = vsub.f32 %v1383, %v1406
        %v1417 = vsub.f32 %v1384, %v1409
        %v1418 = vmul.f32 %v1410, 1.442695
        %v1419 = vpow.pop %v1418
        %v1420 = vmul.f32 %v1411, 1.442695
        %v1421 = vpow.pop %v1420
        %v1422 = vmul.f32 %v1412, 1.442695
        %v1423 = vpow.pop %v1422
        %v1424 = vmul.f32 %v1413, 1.442695
        %v1425 = vpow.pop %v1424
        %v1426 = vmul.f32 %v1414, 1.442695
        %v1427 = vpow.pop %v1426
        %v1428 = vmul.f32 %v1415, 1.442695
        %v1429 = vpow.pop %v1428
        %v1430 = vmul.f32 %v1416, 1.442695
        %v1431 = vpow.pop %v1430
        %v1432 = vmul.f32 %v1417, 1.442695
        %v1433 = vpow.pop %v1432
        %v1434 = vsel %vm1385, %v1419, 0.0
        %1435 = vadd.xlane.f32.xlu0 %v1434
        %v1436 = vpop.xlane.xlu0 %1435
        %v1437 = vsel %vm1385, %v1421, 0.0
        %1438 = vadd.xlane.f32.xlu0 %v1437
        %v1439 = vpop.xlane.xlu0 %1438
        %v1440 = vsel %vm1385, %v1423, 0.0
        %1441 = vadd.xlane.f32.xlu0 %v1440
        %v1442 = vpop.xlane.xlu0 %1441
        %v1443 = vsel %vm1385, %v1425, 0.0
        %1444 = vadd.xlane.f32.xlu0 %v1443
        %v1445 = vpop.xlane.xlu0 %1444
        %v1446 = vsel %vm1385, %v1427, 0.0
        %1447 = vadd.xlane.f32.xlu0 %v1446
        %v1448 = vpop.xlane.xlu0 %1447
        %v1449 = vsel %vm1385, %v1429, 0.0
        %1450 = vadd.xlane.f32.xlu0 %v1449
        %v1451 = vpop.xlane.xlu0 %1450
        %v1452 = vsel %vm1385, %v1431, 0.0
        %1453 = vadd.xlane.f32.xlu0 %v1452
        %v1454 = vpop.xlane.xlu0 %1453
        %v1455 = vsel %vm1385, %v1433, 0.0
        %1456 = vadd.xlane.f32.xlu0 %v1455
        %v1457 = vpop.xlane.xlu0 %1456
        %v1458 = vrcp.pop %v1436
        %v1459 = vrcp.pop %v1439
        %v1460 = vrcp.pop %v1442
        %v1461 = vrcp.pop %v1445
        %v1462 = vrcp.pop %v1448
        %v1463 = vrcp.pop %v1451
        %v1464 = vrcp.pop %v1454
        %v1465 = vrcp.pop %v1457
        %v1466 = vmul.f32 %v1419, %v1458
        %v1467 = vmul.f32 %v1421, %v1459
        %v1468 = vmul.f32 %v1423, %v1460
        %v1469 = vmul.f32 %v1425, %v1461
        %v1470 = vmul.f32 %v1427, %v1462
        %v1471 = vmul.f32 %v1429, %v1463
        %v1472 = vmul.f32 %v1431, %v1464
        %v1473 = vmul.f32 %v1433, %v1465
        %1474 = vst.msk [vmem:[%s461] sm:$0xff] %vm1385, %v1466
        %1475 = vst.msk [vmem:[%s461 + $0x8] sm:$0xff] %vm1385, %v1467
        %1476 = vst.msk [vmem:[%s461 + $0x10] sm:$0xff] %vm1385, %v1468
        %1477 = vst.msk [vmem:[%s461 + $0x18] sm:$0xff] %vm1385, %v1469
        %1478 = vst.msk [vmem:[%s461 + $0x20] sm:$0xff] %vm1385, %v1470
        %1479 = vst.msk [vmem:[%s461 + $0x28] sm:$0xff] %vm1385, %v1471
        %1480 = vst.msk [vmem:[%s461 + $0x30] sm:$0xff] %vm1385, %v1472
        %1481 = vst.msk [vmem:[%s461 + $0x38] sm:$0xff] %vm1385, %v1473
        %v1483 = vsel %vm1385, %v1466, 0
        %1485 = vmatprep.subr.mxu0 0.0
        %1486 = vmatpush1.msra.mxu0 0.0
        %1487 = vmatprep.subr.mxu0 0.0
        %1488 = vmatpush1.msra.mxu0 0.0
        %1489 = vmatprep.subr.mxu0 0.0
        %1490 = vmatpush1.msra.mxu0 0.0
        %1491 = vmatprep.subr.mxu0 0.0
        %1492 = vmatpush1.msra.mxu0 0.0
        %1493 = vmatprep.subr.mxu0 0.0
        %1494 = vmatpush1.msra.mxu0 0.0
        %1495 = vmatprep.subr.mxu0 0.0
        %1496 = vmatpush1.msra.mxu0 0.0
        %1497 = vmatprep.subr.mxu0 0.0
        %1498 = vmatpush1.msra.mxu0 0.0
        %1499 = vmatprep.subr.mxu0 0.0
        %1500 = vmatpush1.msra.mxu0 0.0
        %1501 = vmatprep.subr.mxu0 0.0
        %1502 = vmatpush1.msra.mxu0 0.0
        %1503 = vmatprep.subr.mxu0 0.0
        %1504 = vmatpush1.msra.mxu0 0.0
        %1505 = vmatprep.subr.mxu0 0.0
        %1506 = vmatpush1.msra.mxu0 0.0
        %1507 = vmatprep.subr.mxu0 0.0
        %1508 = vmatpush1.msra.mxu0 0.0
        %1509 = vmatprep.subr.mxu0 0.0
        %1510 = vmatpush1.msra.mxu0 0.0
        %1511 = vmatprep.subr.mxu0 0.0
        %1512 = vmatpush1.msra.mxu0 0.0
        %1513 = vmatprep.subr.mxu0 0.0
        %1514 = vmatpush1.msra.mxu0 0.0
        %1515 = vmatprep.subr.mxu0 0.0
        %1516 = vmatpush1.msra.mxu0 %v722
        %1517 = vmatprep.subr.mxu0 0.0
        %1518 = vmatpush2.msra.mxu0 0.0
        %1519 = vmatprep.subr.mxu0 0.0
        %1520 = vmatpush2.msra.mxu0 0.0
        %1521 = vmatprep.subr.mxu0 0.0
        %1522 = vmatpush2.msra.mxu0 0.0
        %1523 = vmatprep.subr.mxu0 0.0
        %1524 = vmatpush2.msra.mxu0 0.0
        %1525 = vmatprep.subr.mxu0 0.0
        %1526 = vmatpush2.msra.mxu0 0.0
        %1527 = vmatprep.subr.mxu0 0.0
        %1528 = vmatpush2.msra.mxu0 0.0
        %1529 = vmatprep.subr.mxu0 0.0
        %1530 = vmatpush2.msra.mxu0 0.0
        %1531 = vmatprep.subr.mxu0 0.0
        %1532 = vmatpush2.msra.mxu0 0.0
        %1533 = vmatprep.subr.mxu0 0.0
        %1534 = vmatpush2.msra.mxu0 0.0
        %1535 = vmatprep.subr.mxu0 0.0
        %1536 = vmatpush2.msra.mxu0 0.0
        %1537 = vmatprep.subr.mxu0 0.0
        %1538 = vmatpush2.msra.mxu0 0.0
        %1539 = vmatprep.subr.mxu0 0.0
        %1540 = vmatpush2.msra.mxu0 0.0
        %1541 = vmatprep.subr.mxu0 0.0
        %1542 = vmatpush2.msra.mxu0 0.0
        %1543 = vmatprep.subr.mxu0 0.0
        %1544 = vmatpush2.msra.mxu0 0.0
        %1545 = vmatprep.subr.mxu0 0.0
        %1546 = vmatpush2.msra.mxu0 0.0
        %1547 = vmatprep.subr.mxu0 0.0
        %1548 = vmatpush2.msra.mxu0 0.0
        %1549 = vmatprep.mubr.f32.mxu0 0.0
        %1550 = vmatmul.mubr.f32.gmra.mxu0 %v1483
        %v1551 = vpop.f32.mrf.mxu0
        %v1552 = vadd.f32 0.0, %v1551
        %v1553 = vpop.f32.mrf.mxu0
        %1554 = vdwg.mxu0
        %v1556 = vsel %vm1385, %v1467, 0
        %1558 = vmatprep.subr.mxu0 0.0
        %1559 = vmatpush1.msra.mxu0 0.0
        %1560 = vmatprep.subr.mxu0 0.0
        %1561 = vmatpush1.msra.mxu0 0.0
        %1562 = vmatprep.subr.mxu0 0.0
        %1563 = vmatpush1.msra.mxu0 0.0
        %1564 = vmatprep.subr.mxu0 0.0
        %1565 = vmatpush1.msra.mxu0 0.0
        %1566 = vmatprep.subr.mxu0 0.0
        %1567 = vmatpush1.msra.mxu0 0.0
        %1568 = vmatprep.subr.mxu0 0.0
        %1569 = vmatpush1.msra.mxu0 0.0
        %1570 = vmatprep.subr.mxu0 0.0
        %1571 = vmatpush1.msra.mxu0 0.0
        %1572 = vmatprep.subr.mxu0 0.0
        %1573 = vmatpush1.msra.mxu0 0.0
        %1574 = vmatprep.subr.mxu0 0.0
        %1575 = vmatpush1.msra.mxu0 0.0
        %1576 = vmatprep.subr.mxu0 0.0
        %1577 = vmatpush1.msra.mxu0 0.0
        %1578 = vmatprep.subr.mxu0 0.0
        %1579 = vmatpush1.msra.mxu0 0.0
        %1580 = vmatprep.subr.mxu0 0.0
        %1581 = vmatpush1.msra.mxu0 0.0
        %1582 = vmatprep.subr.mxu0 0.0
        %1583 = vmatpush1.msra.mxu0 0.0
        %1584 = vmatprep.subr.mxu0 0.0
        %1585 = vmatpush1.msra.mxu0 0.0
        %1586 = vmatprep.subr.mxu0 0.0
        %1587 = vmatpush1.msra.mxu0 0.0
        %1588 = vmatprep.subr.mxu0 0.0
        %1589 = vmatpush1.msra.mxu0 %v757
        %1590 = vmatprep.subr.mxu0 0.0
        %1591 = vmatpush2.msra.mxu0 0.0
        %1592 = vmatprep.subr.mxu0 0.0
        %1593 = vmatpush2.msra.mxu0 0.0
        %1594 = vmatprep.subr.mxu0 0.0
        %1595 = vmatpush2.msra.mxu0 0.0
        %1596 = vmatprep.subr.mxu0 0.0
        %1597 = vmatpush2.msra.mxu0 0.0
        %1598 = vmatprep.subr.mxu0 0.0
        %1599 = vmatpush2.msra.mxu0 0.0
        %1600 = vmatprep.subr.mxu0 0.0
        %1601 = vmatpush2.msra.mxu0 0.0
        %1602 = vmatprep.subr.mxu0 0.0
        %1603 = vmatpush2.msra.mxu0 0.0
        %1604 = vmatprep.subr.mxu0 0.0
        %1605 = vmatpush2.msra.mxu0 0.0
        %1606 = vmatprep.subr.mxu0 0.0
        %1607 = vmatpush2.msra.mxu0 0.0
        %1608 = vmatprep.subr.mxu0 0.0
        %1609 = vmatpush2.msra.mxu0 0.0
        %1610 = vmatprep.subr.mxu0 0.0
        %1611 = vmatpush2.msra.mxu0 0.0
        %1612 = vmatprep.subr.mxu0 0.0
        %1613 = vmatpush2.msra.mxu0 0.0
        %1614 = vmatprep.subr.mxu0 0.0
        %1615 = vmatpush2.msra.mxu0 0.0
        %1616 = vmatprep.subr.mxu0 0.0
        %1617 = vmatpush2.msra.mxu0 0.0
        %1618 = vmatprep.subr.mxu0 0.0
        %1619 = vmatpush2.msra.mxu0 0.0
        %1620 = vmatprep.subr.mxu0 0.0
        %1621 = vmatpush2.msra.mxu0 0.0
        %1622 = vmatprep.mubr.f32.mxu0 0.0
        %1623 = vmatmul.mubr.f32.gmra.mxu0 %v1556
        %v1624 = vpop.f32.mrf.mxu0
        %v1625 = vadd.f32 0.0, %v1624
        %v1626 = vpop.f32.mrf.mxu0
        %1627 = vdwg.mxu0
        %v1629 = vsel %vm1385, %v1468, 0
        %1631 = vmatprep.subr.mxu0 0.0
        %1632 = vmatpush1.msra.mxu0 0.0
        %1633 = vmatprep.subr.mxu0 0.0
        %1634 = vmatpush1.msra.mxu0 0.0
        %1635 = vmatprep.subr.mxu0 0.0
        %1636 = vmatpush1.msra.mxu0 0.0
        %1637 = vmatprep.subr.mxu0 0.0
        %1638 = vmatpush1.msra.mxu0 0.0
        %1639 = vmatprep.subr.mxu0 0.0
        %1640 = vmatpush1.msra.mxu0 0.0
        %1641 = vmatprep.subr.mxu0 0.0
        %1642 = vmatpush1.msra.mxu0 0.0
        %1643 = vmatprep.subr.mxu0 0.0
        %1644 = vmatpush1.msra.mxu0 0.0
        %1645 = vmatprep.subr.mxu0 0.0
        %1646 = vmatpush1.msra.mxu0 0.0
        %1647 = vmatprep.subr.mxu0 0.0
        %1648 = vmatpush1.msra.mxu0 0.0
        %1649 = vmatprep.subr.mxu0 0.0
        %1650 = vmatpush1.msra.mxu0 0.0
        %1651 = vmatprep.subr.mxu0 0.0
        %1652 = vmatpush1.msra.mxu0 0.0
        %1653 = vmatprep.subr.mxu0 0.0
        %1654 = vmatpush1.msra.mxu0 0.0
        %1655 = vmatprep.subr.mxu0 0.0
        %1656 = vmatpush1.msra.mxu0 0.0
        %1657 = vmatprep.subr.mxu0 0.0
        %1658 = vmatpush1.msra.mxu0 0.0
        %1659 = vmatprep.subr.mxu0 0.0
        %1660 = vmatpush1.msra.mxu0 0.0
        %1661 = vmatprep.subr.mxu0 0.0
        %1662 = vmatpush1.msra.mxu0 %v760
        %1663 = vmatprep.subr.mxu0 0.0
        %1664 = vmatpush2.msra.mxu0 0.0
        %1665 = vmatprep.subr.mxu0 0.0
        %1666 = vmatpush2.msra.mxu0 0.0
        %1667 = vmatprep.subr.mxu0 0.0
        %1668 = vmatpush2.msra.mxu0 0.0
        %1669 = vmatprep.subr.mxu0 0.0
        %1670 = vmatpush2.msra.mxu0 0.0
        %1671 = vmatprep.subr.mxu0 0.0
        %1672 = vmatpush2.msra.mxu0 0.0
        %1673 = vmatprep.subr.mxu0 0.0
        %1674 = vmatpush2.msra.mxu0 0.0
        %1675 = vmatprep.subr.mxu0 0.0
        %1676 = vmatpush2.msra.mxu0 0.0
        %1677 = vmatprep.subr.mxu0 0.0
        %1678 = vmatpush2.msra.mxu0 0.0
        %1679 = vmatprep.subr.mxu0 0.0
        %1680 = vmatpush2.msra.mxu0 0.0
        %1681 = vmatprep.subr.mxu0 0.0
        %1682 = vmatpush2.msra.mxu0 0.0
        %1683 = vmatprep.subr.mxu0 0.0
        %1684 = vmatpush2.msra.mxu0 0.0
        %1685 = vmatprep.subr.mxu0 0.0
        %1686 = vmatpush2.msra.mxu0 0.0
        %1687 = vmatprep.subr.mxu0 0.0
        %1688 = vmatpush2.msra.mxu0 0.0
        %1689 = vmatprep.subr.mxu0 0.0
        %1690 = vmatpush2.msra.mxu0 0.0
        %1691 = vmatprep.subr.mxu0 0.0
        %1692 = vmatpush2.msra.mxu0 0.0
        %1693 = vmatprep.subr.mxu0 0.0
        %1694 = vmatpush2.msra.mxu0 0.0
        %1695 = vmatprep.mubr.f32.mxu0 0.0
        %1696 = vmatmul.mubr.f32.gmra.mxu0 %v1629
        %v1697 = vpop.f32.mrf.mxu0
        %v1698 = vadd.f32 0.0, %v1697
        %v1699 = vpop.f32.mrf.mxu0
        %1700 = vdwg.mxu0
        %v1702 = vsel %vm1385, %v1469, 0
        %1704 = vmatprep.subr.mxu0 0.0
        %1705 = vmatpush1.msra.mxu0 0.0
        %1706 = vmatprep.subr.mxu0 0.0
        %1707 = vmatpush1.msra.mxu0 0.0
        %1708 = vmatprep.subr.mxu0 0.0
        %1709 = vmatpush1.msra.mxu0 0.0
        %1710 = vmatprep.subr.mxu0 0.0
        %1711 = vmatpush1.msra.mxu0 0.0
        %1712 = vmatprep.subr.mxu0 0.0
        %1713 = vmatpush1.msra.mxu0 0.0
        %1714 = vmatprep.subr.mxu0 0.0
        %1715 = vmatpush1.msra.mxu0 0.0
        %1716 = vmatprep.subr.mxu0 0.0
        %1717 = vmatpush1.msra.mxu0 0.0
        %1718 = vmatprep.subr.mxu0 0.0
        %1719 = vmatpush1.msra.mxu0 0.0
        %1720 = vmatprep.subr.mxu0 0.0
        %1721 = vmatpush1.msra.mxu0 0.0
        %1722 = vmatprep.subr.mxu0 0.0
        %1723 = vmatpush1.msra.mxu0 0.0
        %1724 = vmatprep.subr.mxu0 0.0
        %1725 = vmatpush1.msra.mxu0 0.0
        %1726 = vmatprep.subr.mxu0 0.0
        %1727 = vmatpush1.msra.mxu0 0.0
        %1728 = vmatprep.subr.mxu0 0.0
        %1729 = vmatpush1.msra.mxu0 0.0
        %1730 = vmatprep.subr.mxu0 0.0
        %1731 = vmatpush1.msra.mxu0 0.0
        %1732 = vmatprep.subr.mxu0 0.0
        %1733 = vmatpush1.msra.mxu0 0.0
        %1734 = vmatprep.subr.mxu0 0.0
        %1735 = vmatpush1.msra.mxu0 %v763
        %1736 = vmatprep.subr.mxu0 0.0
        %1737 = vmatpush2.msra.mxu0 0.0
        %1738 = vmatprep.subr.mxu0 0.0
        %1739 = vmatpush2.msra.mxu0 0.0
        %1740 = vmatprep.subr.mxu0 0.0
        %1741 = vmatpush2.msra.mxu0 0.0
        %1742 = vmatprep.subr.mxu0 0.0
        %1743 = vmatpush2.msra.mxu0 0.0
        %1744 = vmatprep.subr.mxu0 0.0
        %1745 = vmatpush2.msra.mxu0 0.0
        %1746 = vmatprep.subr.mxu0 0.0
        %1747 = vmatpush2.msra.mxu0 0.0
        %1748 = vmatprep.subr.mxu0 0.0
        %1749 = vmatpush2.msra.mxu0 0.0
        %1750 = vmatprep.subr.mxu0 0.0
        %1751 = vmatpush2.msra.mxu0 0.0
        %1752 = vmatprep.subr.mxu0 0.0
        %1753 = vmatpush2.msra.mxu0 0.0
        %1754 = vmatprep.subr.mxu0 0.0
        %1755 = vmatpush2.msra.mxu0 0.0
        %1756 = vmatprep.subr.mxu0 0.0
        %1757 = vmatpush2.msra.mxu0 0.0
        %1758 = vmatprep.subr.mxu0 0.0
        %1759 = vmatpush2.msra.mxu0 0.0
        %1760 = vmatprep.subr.mxu0 0.0
        %1761 = vmatpush2.msra.mxu0 0.0
        %1762 = vmatprep.subr.mxu0 0.0
        %1763 = vmatpush2.msra.mxu0 0.0
        %1764 = vmatprep.subr.mxu0 0.0
        %1765 = vmatpush2.msra.mxu0 0.0
        %1766 = vmatprep.subr.mxu0 0.0
        %1767 = vmatpush2.msra.mxu0 0.0
        %1768 = vmatprep.mubr.f32.mxu0 0.0
        %1769 = vmatmul.mubr.f32.gmra.mxu0 %v1702
        %v1770 = vpop.f32.mrf.mxu0
        %v1771 = vadd.f32 0.0, %v1770
        %v1772 = vpop.f32.mrf.mxu0
        %1773 = vdwg.mxu0
        %v1775 = vsel %vm1385, %v1470, 0
        %1777 = vmatprep.subr.mxu0 0.0
        %1778 = vmatpush1.msra.mxu0 0.0
        %1779 = vmatprep.subr.mxu0 0.0
        %1780 = vmatpush1.msra.mxu0 0.0
        %1781 = vmatprep.subr.mxu0 0.0
        %1782 = vmatpush1.msra.mxu0 0.0
        %1783 = vmatprep.subr.mxu0 0.0
        %1784 = vmatpush1.msra.mxu0 0.0
        %1785 = vmatprep.subr.mxu0 0.0
        %1786 = vmatpush1.msra.mxu0 0.0
        %1787 = vmatprep.subr.mxu0 0.0
        %1788 = vmatpush1.msra.mxu0 0.0
        %1789 = vmatprep.subr.mxu0 0.0
        %1790 = vmatpush1.msra.mxu0 0.0
        %1791 = vmatprep.subr.mxu0 0.0
        %1792 = vmatpush1.msra.mxu0 0.0
        %1793 = vmatprep.subr.mxu0 0.0
        %1794 = vmatpush1.msra.mxu0 0.0
        %1795 = vmatprep.subr.mxu0 0.0
        %1796 = vmatpush1.msra.mxu0 0.0
        %1797 = vmatprep.subr.mxu0 0.0
        %1798 = vmatpush1.msra.mxu0 0.0
        %1799 = vmatprep.subr.mxu0 0.0
        %1800 = vmatpush1.msra.mxu0 0.0
        %1801 = vmatprep.subr.mxu0 0.0
        %1802 = vmatpush1.msra.mxu0 0.0
        %1803 = vmatprep.subr.mxu0 0.0
        %1804 = vmatpush1.msra.mxu0 0.0
        %1805 = vmatprep.subr.mxu0 0.0
        %1806 = vmatpush1.msra.mxu0 0.0
        %1807 = vmatprep.subr.mxu0 0.0
        %1808 = vmatpush1.msra.mxu0 %v766
        %1809 = vmatprep.subr.mxu0 0.0
        %1810 = vmatpush2.msra.mxu0 0.0
        %1811 = vmatprep.subr.mxu0 0.0
        %1812 = vmatpush2.msra.mxu0 0.0
        %1813 = vmatprep.subr.mxu0 0.0
        %1814 = vmatpush2.msra.mxu0 0.0
        %1815 = vmatprep.subr.mxu0 0.0
        %1816 = vmatpush2.msra.mxu0 0.0
        %1817 = vmatprep.subr.mxu0 0.0
        %1818 = vmatpush2.msra.mxu0 0.0
        %1819 = vmatprep.subr.mxu0 0.0
        %1820 = vmatpush2.msra.mxu0 0.0
        %1821 = vmatprep.subr.mxu0 0.0
        %1822 = vmatpush2.msra.mxu0 0.0
        %1823 = vmatprep.subr.mxu0 0.0
        %1824 = vmatpush2.msra.mxu0 0.0
        %1825 = vmatprep.subr.mxu0 0.0
        %1826 = vmatpush2.msra.mxu0 0.0
        %1827 = vmatprep.subr.mxu0 0.0
        %1828 = vmatpush2.msra.mxu0 0.0
        %1829 = vmatprep.subr.mxu0 0.0
        %1830 = vmatpush2.msra.mxu0 0.0
        %1831 = vmatprep.subr.mxu0 0.0
        %1832 = vmatpush2.msra.mxu0 0.0
        %1833 = vmatprep.subr.mxu0 0.0
        %1834 = vmatpush2.msra.mxu0 0.0
        %1835 = vmatprep.subr.mxu0 0.0
        %1836 = vmatpush2.msra.mxu0 0.0
        %1837 = vmatprep.subr.mxu0 0.0
        %1838 = vmatpush2.msra.mxu0 0.0
        %1839 = vmatprep.subr.mxu0 0.0
        %1840 = vmatpush2.msra.mxu0 0.0
        %1841 = vmatprep.mubr.f32.mxu0 0.0
        %1842 = vmatmul.mubr.f32.gmra.mxu0 %v1775
        %v1843 = vpop.f32.mrf.mxu0
        %v1844 = vadd.f32 0.0, %v1843
        %v1845 = vpop.f32.mrf.mxu0
        %1846 = vdwg.mxu0
        %v1848 = vsel %vm1385, %v1471, 0
        %1850 = vmatprep.subr.mxu0 0.0
        %1851 = vmatpush1.msra.mxu0 0.0
        %1852 = vmatprep.subr.mxu0 0.0
        %1853 = vmatpush1.msra.mxu0 0.0
        %1854 = vmatprep.subr.mxu0 0.0
        %1855 = vmatpush1.msra.mxu0 0.0
        %1856 = vmatprep.subr.mxu0 0.0
        %1857 = vmatpush1.msra.mxu0 0.0
        %1858 = vmatprep.subr.mxu0 0.0
        %1859 = vmatpush1.msra.mxu0 0.0
        %1860 = vmatprep.subr.mxu0 0.0
        %1861 = vmatpush1.msra.mxu0 0.0
        %1862 = vmatprep.subr.mxu0 0.0
        %1863 = vmatpush1.msra.mxu0 0.0
        %1864 = vmatprep.subr.mxu0 0.0
        %1865 = vmatpush1.msra.mxu0 0.0
        %1866 = vmatprep.subr.mxu0 0.0
        %1867 = vmatpush1.msra.mxu0 0.0
        %1868 = vmatprep.subr.mxu0 0.0
        %1869 = vmatpush1.msra.mxu0 0.0
        %1870 = vmatprep.subr.mxu0 0.0
        %1871 = vmatpush1.msra.mxu0 0.0
        %1872 = vmatprep.subr.mxu0 0.0
        %1873 = vmatpush1.msra.mxu0 0.0
        %1874 = vmatprep.subr.mxu0 0.0
        %1875 = vmatpush1.msra.mxu0 0.0
        %1876 = vmatprep.subr.mxu0 0.0
        %1877 = vmatpush1.msra.mxu0 0.0
        %1878 = vmatprep.subr.mxu0 0.0
        %1879 = vmatpush1.msra.mxu0 0.0
        %1880 = vmatprep.subr.mxu0 0.0
        %1881 = vmatpush1.msra.mxu0 %v769
        %1882 = vmatprep.subr.mxu0 0.0
        %1883 = vmatpush2.msra.mxu0 0.0
        %1884 = vmatprep.subr.mxu0 0.0
        %1885 = vmatpush2.msra.mxu0 0.0
        %1886 = vmatprep.subr.mxu0 0.0
        %1887 = vmatpush2.msra.mxu0 0.0
        %1888 = vmatprep.subr.mxu0 0.0
        %1889 = vmatpush2.msra.mxu0 0.0
        %1890 = vmatprep.subr.mxu0 0.0
        %1891 = vmatpush2.msra.mxu0 0.0
        %1892 = vmatprep.subr.mxu0 0.0
        %1893 = vmatpush2.msra.mxu0 0.0
        %1894 = vmatprep.subr.mxu0 0.0
        %1895 = vmatpush2.msra.mxu0 0.0
        %1896 = vmatprep.subr.mxu0 0.0
        %1897 = vmatpush2.msra.mxu0 0.0
        %1898 = vmatprep.subr.mxu0 0.0
        %1899 = vmatpush2.msra.mxu0 0.0
        %1900 = vmatprep.subr.mxu0 0.0
        %1901 = vmatpush2.msra.mxu0 0.0
        %1902 = vmatprep.subr.mxu0 0.0
        %1903 = vmatpush2.msra.mxu0 0.0
        %1904 = vmatprep.subr.mxu0 0.0
        %1905 = vmatpush2.msra.mxu0 0.0
        %1906 = vmatprep.subr.mxu0 0.0
        %1907 = vmatpush2.msra.mxu0 0.0
        %1908 = vmatprep.subr.mxu0 0.0
        %1909 = vmatpush2.msra.mxu0 0.0
        %1910 = vmatprep.subr.mxu0 0.0
        %1911 = vmatpush2.msra.mxu0 0.0
        %1912 = vmatprep.subr.mxu0 0.0
        %1913 = vmatpush2.msra.mxu0 0.0
        %1914 = vmatprep.mubr.f32.mxu0 0.0
        %1915 = vmatmul.mubr.f32.gmra.mxu0 %v1848
        %v1916 = vpop.f32.mrf.mxu0
        %v1917 = vadd.f32 0.0, %v1916
        %v1918 = vpop.f32.mrf.mxu0
        %1919 = vdwg.mxu0
        %v1921 = vsel %vm1385, %v1472, 0
        %1923 = vmatprep.subr.mxu0 0.0
        %1924 = vmatpush1.msra.mxu0 0.0
        %1925 = vmatprep.subr.mxu0 0.0
        %1926 = vmatpush1.msra.mxu0 0.0
        %1927 = vmatprep.subr.mxu0 0.0
        %1928 = vmatpush1.msra.mxu0 0.0
        %1929 = vmatprep.subr.mxu0 0.0
        %1930 = vmatpush1.msra.mxu0 0.0
        %1931 = vmatprep.subr.mxu0 0.0
        %1932 = vmatpush1.msra.mxu0 0.0
        %1933 = vmatprep.subr.mxu0 0.0
        %1934 = vmatpush1.msra.mxu0 0.0
        %1935 = vmatprep.subr.mxu0 0.0
        %1936 = vmatpush1.msra.mxu0 0.0
        %1937 = vmatprep.subr.mxu0 0.0
        %1938 = vmatpush1.msra.mxu0 0.0
        %1939 = vmatprep.subr.mxu0 0.0
        %1940 = vmatpush1.msra.mxu0 0.0
        %1941 = vmatprep.subr.mxu0 0.0
        %1942 = vmatpush1.msra.mxu0 0.0
        %1943 = vmatprep.subr.mxu0 0.0
        %1944 = vmatpush1.msra.mxu0 0.0
        %1945 = vmatprep.subr.mxu0 0.0
        %1946 = vmatpush1.msra.mxu0 0.0
        %1947 = vmatprep.subr.mxu0 0.0
        %1948 = vmatpush1.msra.mxu0 0.0
        %1949 = vmatprep.subr.mxu0 0.0
        %1950 = vmatpush1.msra.mxu0 0.0
        %1951 = vmatprep.subr.mxu0 0.0
        %1952 = vmatpush1.msra.mxu0 0.0
        %1953 = vmatprep.subr.mxu0 0.0
        %1954 = vmatpush1.msra.mxu0 %v772
        %1955 = vmatprep.subr.mxu0 0.0
        %1956 = vmatpush2.msra.mxu0 0.0
        %1957 = vmatprep.subr.mxu0 0.0
        %1958 = vmatpush2.msra.mxu0 0.0
        %1959 = vmatprep.subr.mxu0 0.0
        %1960 = vmatpush2.msra.mxu0 0.0
        %1961 = vmatprep.subr.mxu0 0.0
        %1962 = vmatpush2.msra.mxu0 0.0
        %1963 = vmatprep.subr.mxu0 0.0
        %1964 = vmatpush2.msra.mxu0 0.0
        %1965 = vmatprep.subr.mxu0 0.0
        %1966 = vmatpush2.msra.mxu0 0.0
        %1967 = vmatprep.subr.mxu0 0.0
        %1968 = vmatpush2.msra.mxu0 0.0
        %1969 = vmatprep.subr.mxu0 0.0
        %1970 = vmatpush2.msra.mxu0 0.0
        %1971 = vmatprep.subr.mxu0 0.0
        %1972 = vmatpush2.msra.mxu0 0.0
        %1973 = vmatprep.subr.mxu0 0.0
        %1974 = vmatpush2.msra.mxu0 0.0
        %1975 = vmatprep.subr.mxu0 0.0
        %1976 = vmatpush2.msra.mxu0 0.0
        %1977 = vmatprep.subr.mxu0 0.0
        %1978 = vmatpush2.msra.mxu0 0.0
        %1979 = vmatprep.subr.mxu0 0.0
        %1980 = vmatpush2.msra.mxu0 0.0
        %1981 = vmatprep.subr.mxu0 0.0
        %1982 = vmatpush2.msra.mxu0 0.0
        %1983 = vmatprep.subr.mxu0 0.0
        %1984 = vmatpush2.msra.mxu0 0.0
        %1985 = vmatprep.subr.mxu0 0.0
        %1986 = vmatpush2.msra.mxu0 0.0
        %1987 = vmatprep.mubr.f32.mxu0 0.0
        %1988 = vmatmul.mubr.f32.gmra.mxu0 %v1921
        %v1989 = vpop.f32.mrf.mxu0
        %v1990 = vadd.f32 0.0, %v1989
        %v1991 = vpop.f32.mrf.mxu0
        %1992 = vdwg.mxu0
        %v1994 = vsel %vm1385, %v1473, 0
        %1996 = vmatprep.subr.mxu0 0.0
        %1997 = vmatpush1.msra.mxu0 0.0
        %1998 = vmatprep.subr.mxu0 0.0
        %1999 = vmatpush1.msra.mxu0 0.0
        %2000 = vmatprep.subr.mxu0 0.0
        %2001 = vmatpush1.msra.mxu0 0.0
        %2002 = vmatprep.subr.mxu0 0.0
        %2003 = vmatpush1.msra.mxu0 0.0
        %2004 = vmatprep.subr.mxu0 0.0
        %2005 = vmatpush1.msra.mxu0 0.0
        %2006 = vmatprep.subr.mxu0 0.0
        %2007 = vmatpush1.msra.mxu0 0.0
        %2008 = vmatprep.subr.mxu0 0.0
        %2009 = vmatpush1.msra.mxu0 0.0
        %2010 = vmatprep.subr.mxu0 0.0
        %2011 = vmatpush1.msra.mxu0 0.0
        %2012 = vmatprep.subr.mxu0 0.0
        %2013 = vmatpush1.msra.mxu0 0.0
        %2014 = vmatprep.subr.mxu0 0.0
        %2015 = vmatpush1.msra.mxu0 0.0
        %2016 = vmatprep.subr.mxu0 0.0
        %2017 = vmatpush1.msra.mxu0 0.0
        %2018 = vmatprep.subr.mxu0 0.0
        %2019 = vmatpush1.msra.mxu0 0.0
        %2020 = vmatprep.subr.mxu0 0.0
        %2021 = vmatpush1.msra.mxu0 0.0
        %2022 = vmatprep.subr.mxu0 0.0
        %2023 = vmatpush1.msra.mxu0 0.0
        %2024 = vmatprep.subr.mxu0 0.0
        %2025 = vmatpush1.msra.mxu0 0.0
        %2026 = vmatprep.subr.mxu0 0.0
        %2027 = vmatpush1.msra.mxu0 %v775
        %2028 = vmatprep.subr.mxu0 0.0
        %2029 = vmatpush2.msra.mxu0 0.0
        %2030 = vmatprep.subr.mxu0 0.0
        %2031 = vmatpush2.msra.mxu0 0.0
        %2032 = vmatprep.subr.mxu0 0.0
        %2033 = vmatpush2.msra.mxu0 0.0
        %2034 = vmatprep.subr.mxu0 0.0
        %2035 = vmatpush2.msra.mxu0 0.0
        %2036 = vmatprep.subr.mxu0 0.0
        %2037 = vmatpush2.msra.mxu0 0.0
        %2038 = vmatprep.subr.mxu0 0.0
        %2039 = vmatpush2.msra.mxu0 0.0
        %2040 = vmatprep.subr.mxu0 0.0
        %2041 = vmatpush2.msra.mxu0 0.0
        %2042 = vmatprep.subr.mxu0 0.0
        %2043 = vmatpush2.msra.mxu0 0.0
        %2044 = vmatprep.subr.mxu0 0.0
        %2045 = vmatpush2.msra.mxu0 0.0
        %2046 = vmatprep.subr.mxu0 0.0
        %2047 = vmatpush2.msra.mxu0 0.0
        %2048 = vmatprep.subr.mxu0 0.0
        %2049 = vmatpush2.msra.mxu0 0.0
        %2050 = vmatprep.subr.mxu0 0.0
        %2051 = vmatpush2.msra.mxu0 0.0
        %2052 = vmatprep.subr.mxu0 0.0
        %2053 = vmatpush2.msra.mxu0 0.0
        %2054 = vmatprep.subr.mxu0 0.0
        %2055 = vmatpush2.msra.mxu0 0.0
        %2056 = vmatprep.subr.mxu0 0.0
        %2057 = vmatpush2.msra.mxu0 0.0
        %2058 = vmatprep.subr.mxu0 0.0
        %2059 = vmatpush2.msra.mxu0 0.0
        %2060 = vmatprep.mubr.f32.mxu0 0.0
        %2061 = vmatmul.mubr.f32.gmra.mxu0 %v1994
        %v2062 = vpop.f32.mrf.mxu0
        %v2063 = vadd.f32 0.0, %v2062
        %v2064 = vpop.f32.mrf.mxu0
        %2065 = vdwg.mxu0
        %2067 = vrot.lane.b32.xlu0 %v1625, 4
        %v2068 = vpop.permute.xlu0 %2067
        %2071 = vrot.lane.b32.xlu0 %v1698, 8
        %v2072 = vpop.permute.xlu0 %2071
        %2075 = vrot.lane.b32.xlu0 %v1771, 12
        %v2076 = vpop.permute.xlu0 %2075
        %2079 = vrot.lane.b32.xlu0 %v1844, 16
        %v2080 = vpop.permute.xlu0 %2079
        %2083 = vrot.lane.b32.xlu0 %v1917, 20
        %v2084 = vpop.permute.xlu0 %2083
        %2087 = vrot.lane.b32.xlu0 %v1990, 24
        %v2088 = vpop.permute.xlu0 %2087
        %2091 = vrot.lane.b32.xlu0 %v2063, 28
        %v2092 = vpop.permute.xlu0 %2091
        %v2094 = vsel %vm777, %v1552, %v2068
        %v2095 = vsel %vm1385, %v2094, %v2072
        %vm2096 = vcmask 97280
        %v2097 = vsel %vm2096, %v2095, %v2076
        %vm2098 = vcmask 130048
        %v2099 = vsel %vm2098, %v2097, %v2080
        %vm2100 = vcmask 162816
        %v2101 = vsel %vm2100, %v2099, %v2084
        %vm2102 = vcmask 195584
        %v2103 = vsel %vm2102, %v2101, %v2088
        %vm2104 = vcmask 228352
        %v2105 = vsel %vm2104, %v2103, %v2092
        %v2106 = vld [vmem:[#allocation10] sm:$0xff]
        %v2107 = vld [vmem:[#allocation10 + $0x8] sm:$0xff]
        %v2108 = vld [vmem:[#allocation10 + $0x10] sm:$0xff]
        %v2109 = vld [vmem:[#allocation10 + $0x18] sm:$0xff]
        %s2110 = scalar_lea.vmem %s6, 3
        %v2111 = vld [vmem:[%s2110] sm:$0x1]
        %v2113 = vlaneseq
        %v2114 = vshrl.u32 %v2113, 7
        %v2115 = vsub.s32 0, %v2114
        %v2116 = vrot.slane %v2111, %v2115
        %v2119 = vsel %vm477, %v2105, 0
        %2121 = vmatprep.subr.mxu0 0.0
        %2122 = vmatpush1.msra.mxu0 0.0
        %2123 = vmatprep.subr.mxu0 0.0
        %2124 = vmatpush1.msra.mxu0 0.0
        %2125 = vmatprep.subr.mxu0 0.0
        %2126 = vmatpush1.msra.mxu0 0.0
        %2127 = vmatprep.subr.mxu0 0.0
        %2128 = vmatpush1.msra.mxu0 0.0
        %2129 = vmatprep.subr.mxu0 0.0
        %2130 = vmatpush1.msra.mxu0 0.0
        %2131 = vmatprep.subr.mxu0 0.0
        %2132 = vmatpush1.msra.mxu0 0.0
        %2133 = vmatprep.subr.mxu0 0.0
        %2134 = vmatpush1.msra.mxu0 0.0
        %2135 = vmatprep.subr.mxu0 0.0
        %2136 = vmatpush1.msra.mxu0 0.0
        %2137 = vmatprep.subr.mxu0 0.0
        %2138 = vmatpush1.msra.mxu0 0.0
        %2139 = vmatprep.subr.mxu0 0.0
        %2140 = vmatpush1.msra.mxu0 0.0
        %2141 = vmatprep.subr.mxu0 0.0
        %2142 = vmatpush1.msra.mxu0 0.0
        %2143 = vmatprep.subr.mxu0 0.0
        %2144 = vmatpush1.msra.mxu0 0.0
        %2145 = vmatprep.subr.mxu0 0.0
        %2146 = vmatpush1.msra.mxu0 %v2109
        %2147 = vmatprep.subr.mxu0 0.0
        %2148 = vmatpush1.msra.mxu0 %v2108
        %2149 = vmatprep.subr.mxu0 0.0
        %2150 = vmatpush1.msra.mxu0 %v2107
        %2151 = vmatprep.subr.mxu0 0.0
        %2152 = vmatpush1.msra.mxu0 %v2106
        %2153 = vmatprep.subr.mxu0 0.0
        %2154 = vmatpush2.msra.mxu0 0.0
        %2155 = vmatprep.subr.mxu0 0.0
        %2156 = vmatpush2.msra.mxu0 0.0
        %2157 = vmatprep.subr.mxu0 0.0
        %2158 = vmatpush2.msra.mxu0 0.0
        %2159 = vmatprep.subr.mxu0 0.0
        %2160 = vmatpush2.msra.mxu0 0.0
        %2161 = vmatprep.subr.mxu0 0.0
        %2162 = vmatpush2.msra.mxu0 0.0
        %2163 = vmatprep.subr.mxu0 0.0
        %2164 = vmatpush2.msra.mxu0 0.0
        %2165 = vmatprep.subr.mxu0 0.0
        %2166 = vmatpush2.msra.mxu0 0.0
        %2167 = vmatprep.subr.mxu0 0.0
        %2168 = vmatpush2.msra.mxu0 0.0
        %2169 = vmatprep.subr.mxu0 0.0
        %2170 = vmatpush2.msra.mxu0 0.0
        %2171 = vmatprep.subr.mxu0 0.0
        %2172 = vmatpush2.msra.mxu0 0.0
        %2173 = vmatprep.subr.mxu0 0.0
        %2174 = vmatpush2.msra.mxu0 0.0
        %2175 = vmatprep.subr.mxu0 0.0
        %2176 = vmatpush2.msra.mxu0 0.0
        %2177 = vmatprep.subr.mxu0 0.0
        %2178 = vmatpush2.msra.mxu0 0.0
        %2179 = vmatprep.subr.mxu0 0.0
        %2180 = vmatpush2.msra.mxu0 0.0
        %2181 = vmatprep.subr.mxu0 0.0
        %2182 = vmatpush2.msra.mxu0 0.0
        %2183 = vmatprep.subr.mxu0 0.0
        %2184 = vmatpush2.msra.mxu0 0.0
        %2185 = vmatprep.mubr.f32.mxu0 0.0
        %2186 = vmatmul.mubr.f32.gmra.mxu0 %v2119
        %v2187 = vpop.f32.mrf.mxu0
        %v2188 = vadd.f32 %v2116, %v2187
        %v2189 = vpop.f32.mrf.mxu0
        %2190 = vdwg.mxu0
        %2191 = vst.msk [vmem:[%s454] sm:$0xff] %vm477, %v2188
        %s2192 = sand.u32 %s224, 1
        %s2193 = scalar_lea.sflag [#allocation4], %s2192
        %s2194 = sand.u32 %s224, 1
        %s2195 = smul.addr %s2194, 8
        %s2196 = scalar_lea.vmem [#allocation11], %s2195
        %s2197 = sand.u32 %s252, 1
        %s2198 = scalar_lea.sflag [#allocation13], %s2197
        %s2199 = sand.u32 %s252, 1
        %s2200 = smul.addr %s2199, 64
        %s2201 = scalar_lea.vmem [#allocation12], %s2200
        // Predicated region
        $region69: #{tpu_custom_call.1} parent=47 // pred_check
          %p2202 = pneg %p234
        $region70: #{tpu_custom_call.1} parent=47 // pred_check_branch
          %2204 = sbr.rel (%p2202) target = $region72
        $region71: #{tpu_custom_call.1} parent=47 // pred_region
          %s2206 = ssub.s32 128, 128
          %2207 = vsyncadd %s2193, %s2206
          %s2208 = sadd.s32 %s38, %s37
          %s2209 = smul.addr %s2208, 128
          %s2210 = scalar_lea.hbm %s7, %s2209
          %s2212 = sshll.u32 %s2196, 4
          %s2213 = int_to_ptr.vmem [resolvable:$true] %s2212
          %2215 = dma.vmem_to_hbm [thread:$0]  %s2213, 128, %s2210, %s2193
        $region72: #{tpu_custom_call.1} parent=47 // pred_fallthru
          _
        // Predicated region
        $region73: #{tpu_custom_call.1} parent=47 // pred_check
          %p2216 = pneg %p262
        $region74: #{tpu_custom_call.1} parent=47 // pred_check_branch
          %2218 = sbr.rel (%p2216) target = $region76
        $region75: #{tpu_custom_call.1} parent=47 // pred_region
          %s2220 = ssub.s32 1024, 1024
          %2221 = vsyncadd %s2198, %s2220
          %s2222 = smul.addr %s37, 8
          %s2223 = sadd.s32 %s38, %s2222
          %s2224 = smul.addr %s2223, 128
          %s2225 = scalar_lea.hbm %s8, %s2224
          %s2226 = sshll.u32 %s2201, 4
          %s2227 = int_to_ptr.vmem [resolvable:$true] %s2226
          %2232 = dma.vmem_to_hbm [thread:$0]  %s2227, 1024, %s2225, %s2198, 128, 128, 8
        $region76: #{tpu_custom_call.1} parent=47 // pred_fallthru
          _
      $region48: #{tpu_custom_call.1} parent=5 // pred_fallthru
        _
      %p2233 = scmp.le.s32.totalorder 2, %s28
      // Predicated region
      $region77: #{tpu_custom_call.1} parent=5 // pred_check
        %p2234 = pneg %p2233
      $region78: #{tpu_custom_call.1} parent=5 // pred_check_branch
        %2236 = sbr.rel (%p2234) target = $region80
      $region79: #{tpu_custom_call.1} parent=5 // pred_region
        %s2237 = ssub.s32 %s28, 2
        // Predicated region
        $region81: #{tpu_custom_call.1} parent=79 // pred_check
          %p2238 = pneg %p240
        $region82: #{tpu_custom_call.1} parent=79 // pred_check_branch
          %2240 = sbr.rel (%p2238) target = $region84
        $region83: #{tpu_custom_call.1} parent=79 // pred_region
          %s2241 = sand.u32 %s225, 1
          %s2242 = scalar_lea.sflag [#allocation4], %s2241
          %s2243 = sand.u32 %s225, 1
          %s2244 = smul.addr %s2243, 8
          %s2245 = scalar_lea.vmem [#allocation11], %s2244
          %2246 = dma.done %s2242, 128
        $region84: #{tpu_custom_call.1} parent=79 // pred_fallthru
          _
        // Predicated region
        $region85: #{tpu_custom_call.1} parent=79 // pred_check
          %p2247 = pneg %p268
        $region86: #{tpu_custom_call.1} parent=79 // pred_check_branch
          %2249 = sbr.rel (%p2247) target = $region88
        $region87: #{tpu_custom_call.1} parent=79 // pred_region
          %s2250 = sand.u32 %s253, 1
          %s2251 = scalar_lea.sflag [#allocation13], %s2250
          %s2252 = sand.u32 %s253, 1
          %s2253 = smul.addr %s2252, 64
          %s2254 = scalar_lea.vmem [#allocation12], %s2253
          %2255 = dma.done %s2251, 1024
        $region88: #{tpu_custom_call.1} parent=79 // pred_fallthru
          _
      $region80: #{tpu_custom_call.1} parent=5 // pred_fallthru
        _
    $region6: #{tpu_custom_call.1} parent=1 // loop_footer
      %s32 = sadd.s32 1, %s28
    $region7: #{tpu_custom_call.1} parent=1 // loop_footer_branch
      %27 = sbr.rel target = $region3
    $region8: #{tpu_custom_call.1} parent=1 // loop_exit
      _
    %2256 = vsyncpa [#allocation3], 1
    %s2257 = scalar_lea.sflag [#allocation3], 1
    %2258 = vsyncpa %s2257, 1
    %2259 = vsyncpa [#allocation6], 1
    %s2260 = scalar_lea.sflag [#allocation6], 1
    %2261 = vsyncpa %s2260, 1
    %2262 = vsyncpa [#allocation9], 1
    %2263 = vsyncpa [#allocation4], 1
    %s2264 = scalar_lea.sflag [#allocation4], 1
    %2265 = vsyncpa %s2264, 1
    %2266 = vsyncpa [#allocation13], 1
    %s2267 = scalar_lea.sflag [#allocation13], 1
    %2268 = vsyncpa %s2267, 1

</llo_original>
